<compile_context>
chip_gen: v7x
topology: tpu7x:2x2x1
jax: 0.10.0
libtpu: 0.0.40
codegen_flags: <defaults>
</compile_context>

<pallas_src>
import functools
import math

import jax
import jax.numpy as jnp
from jax.experimental import pallas as pl
from jax.experimental.pallas import tpu as pltpu


# ----------------------------------------------------------------------------
# One-time weight preparation (hoisted out of the forward path): fold BN scale
# and rewrite the convolutions as banded / block-diagonal matrices acting on
# the planar (rows, W*C) layout, where planar lane  w*C + c  <-> pixel column
# w, channel c.  Returned matmul weights are bf16; biases stay f32.
# ----------------------------------------------------------------------------
def _banded_conv3x3(w, scale, W):
    """w: (Kh, Kw, Cin, Cout), scale: (Cout,) -> (Kh, W*Cin, W*Cout)."""
    Kh, Kw, Cin, Cout = w.shape
    wf = w * scale[None, None, None, :]            # fold BN scale
    pad = (Kw - 1) // 2
    p = jnp.arange(W)[:, None, None]               # input pixel column
    q = jnp.arange(W)[None, :, None]               # output pixel column
    k = jnp.arange(Kw)[None, None, :]              # width tap
    sel = (p == q + k - pad).astype(w.dtype)       # truncation == zero pad
    b = jnp.einsum("pqk,hkio->hpiqo", sel, wf)     # (Kh, W, Cin, W, Cout)
    return b.reshape(Kh, W * Cin, W * Cout)


def _blockdiag_conv1x1(w, scale, W):
    """w: (..., Cin, Cout), scale: (Cout,) -> block-diagonal (W*Cin, W*Cout)."""
    wf = w.reshape(w.shape[-2], w.shape[-1]) * scale[None, :]
    Cin, Cout = wf.shape
    eye = jnp.eye(W, dtype=wf.dtype)
    return jnp.einsum("pq,io->piqo", eye, wf).reshape(W * Cin, W * Cout)


def _pad_cin(w, cin_to):
    return jnp.pad(w, ((0, 0), (0, 0), (0, cin_to - w.shape[2]), (0, 0)))


def prepare_tree_operands(p, W, c_in, c_out):
    """Run ONCE (not in the per-call jit path)."""
    C = c_out
    bf16 = jnp.bfloat16
    w_proj, s_proj, b_proj = p["proj"]
    w_t1c1, s_t1c1, b_t1c1 = p["t1c1"]
    w_t1c2, s_t1c2, b_t1c2 = p["t1c2"]
    w_t2c1, s_t2c1, b_t2c1 = p["t2c1"]
    w_t2c2, s_t2c2, b_t2c2 = p["t2c2"]
    w_root, s_root, b_root = p["root"]

    # 3x3 convs -> 3 banded (W*C, W*C) matrices each (t1c1 Cin padded to C).
    wt1c1 = _banded_conv3x3(_pad_cin(w_t1c1, C), s_t1c1, W).astype(bf16)
    wt1c2 = _banded_conv3x3(w_t1c2, s_t1c2, W).astype(bf16)
    wt2c1 = _banded_conv3x3(w_t2c1, s_t2c1, W).astype(bf16)
    wt2c2 = _banded_conv3x3(w_t2c2, s_t2c2, W).astype(bf16)
    # project 1x1 (Cin -> Cout), input channels zero-padded to C.
    wproj = _blockdiag_conv1x1(_pad_cin(w_proj, C), s_proj, W).astype(bf16)
    # Root 1x1 over cat([x2, x1, bottom]): one fused (3*W*C, W*C) weight so the
    # root is a single K=3*W*C dot against a lane-concatenated LHS.
    wr = w_root.reshape(2 * c_out + c_in, c_out)
    wroot = jnp.concatenate(
        [_blockdiag_conv1x1(wr[:c_out], s_root, W),
         _blockdiag_conv1x1(wr[c_out:2 * c_out], s_root, W),
         _blockdiag_conv1x1(jnp.pad(wr[2 * c_out:], ((0, C - c_in), (0, 0))),
                            s_root, W)],
        axis=0).astype(bf16)
    # Per-conv BN biases tiled across W so they add directly onto planar rows.
    biases = jnp.stack(
        [jnp.tile(b, W) for b in (b_proj, b_t1c1, b_t1c2, b_t2c1, b_t2c2, b_root)],
        axis=0).astype(jnp.float32)
    return wt1c1, wt1c2, wt2c1, wt2c2, wproj, wroot, biases


# ----------------------------------------------------------------------------
# Fused Tree kernel. One grid step == Nb images; everything stays in VMEM.
# ----------------------------------------------------------------------------
def _tree_kernel(x_ref, wt1c1_ref, wt1c2_ref, wt2c1_ref, wt2c2_ref,
                 wproj_ref, wroot_ref, bias_ref, o_ref, pad_ref,
                 *, Nb, H, WC, HPS):
    f32 = jnp.float32
    bf16 = jnp.bfloat16

    # Zero ONLY the per-image halo rows.  Unconditional on purpose: each
    # TensorCore has its own scratch under ("parallel",), so a program_id()==0
    # guard would leave the second core's halos uninitialized.  Interior rows
    # are fully overwritten by every conv's staging store.
    zero_row = jnp.zeros((1, WC), bf16)
    for i in range(Nb):
        pad_ref[i * HPS:i * HPS + 1, :] = zero_row
        pad_ref[i * HPS + H + 1:i * HPS + H + 2, :] = zero_row

    x = x_ref[...].astype(f32)          # (Nb*H, WC)  bottom / tree1 input (f32)
    x_bf = x.astype(bf16)               # bf16 view used as dot operand
    b = bias_ref[...]                   # (6, WC) f32 per-conv biases

    def conv3(val_f32, w_ref, bias_row):
        """3x3 conv in planar form; per-image banded dot triples."""
        val_bf = val_f32.astype(bf16)
        w0 = w_ref[0]
        w1 = w_ref[1]
        w2 = w_ref[2]
        # Stage interior rows per image (halo rows stay zero).
        for i in range(Nb):
            pad_ref[i * HPS + 1:i * HPS + 1 + H, :] = val_bf[i * H:(i + 1) * H]
        outs = []
        for i in range(Nb):
            top = pad_ref[i * HPS:i * HPS + H, :]          # rows h-1 (zero at h=0)
            bot = pad_ref[i * HPS + 2:i * HPS + 2 + H, :]  # rows h+1 (zero at h=H-1)
            acc = jnp.dot(top, w0, preferred_element_type=f32)
            # center tap uses the in-register value directly (no VMEM reload)
            acc = acc + jnp.dot(val_bf[i * H:(i + 1) * H], w1,
                                preferred_element_type=f32)
            acc = acc + jnp.dot(bot, w2, preferred_element_type=f32)
            outs.append(acc)
        out = outs[0] if Nb == 1 else jnp.concatenate(outs, axis=0)
        return out + bias_row

    # project: 1x1 conv + BN (no ReLU) -> external residual for tree1.
    residual = jnp.dot(x_bf, wproj_ref[...], preferred_element_type=f32) + b[0:1]
    # tree1 = BasicBlock(Cin -> Cout) with external residual.
    t = jnp.maximum(conv3(x, wt1c1_ref, b[1:2]), 0.0)
    x1 = jnp.maximum(conv3(t, wt1c2_ref, b[2:3]) + residual, 0.0)
    # tree2 = BasicBlock(Cout -> Cout); residual defaults to its own input x1.
    t = jnp.maximum(conv3(x1, wt2c1_ref, b[3:4]), 0.0)
    x2 = jnp.maximum(conv3(t, wt2c2_ref, b[4:5]) + x1, 0.0)
    # Root(x2, x1, bottom): lane-concat -> ONE K=3*WC dot -> BN bias -> +x2 -> ReLU.
    cat = jnp.concatenate([x2.astype(bf16), x1.astype(bf16), x_bf], axis=-1)
    out = jnp.dot(cat, wroot_ref[...], preferred_element_type=f32) + b[5:6] + x2
    o_ref[...] = jnp.maximum(out, 0.0).astype(o_ref.dtype)


def _choose_grid_steps(n):
    """2 grid steps only on parts with 2 TensorCores per device (megacore);
    on 1-TC chips (v5e/v6e) the grid is a serial loop, so one big block wins."""
    kind = ""
    try:
        kind = jax.devices()[0].device_kind.lower()
    except Exception:
        pass
    multi_tc = any(tag in kind for tag in ("v7", "7x", "v4", "v5p"))
    if multi_tc and n >= 2 and n % 2 == 0:
        return 2
    return 1


def tree_forward(x_nchw, prepared, *, c_out, grid_steps):
    """x_nchw: (N, Cin, H, W) f32 like the PyTorch module -> (N, Cout, H, W)."""
    N, c_in, H, W = x_nchw.shape
    C = c_out
    WC = W * C
    assert WC % 128 == 0, "planar rows must be lane-dense (W*C multiple of 128)"
    assert c_in <= C
    assert N % grid_steps == 0
    Nb = N // grid_steps
    HPS = ((H + 2 + 7) // 8) * 8          # 8-aligned per-image slab in staging

    wt1c1, wt1c2, wt2c1, wt2c2, wproj, wroot, biases = prepared

    # NCHW -> NHWC, zero-pad channels to C(=Cout), flatten to planar (N*H, W*C).
    x = jnp.transpose(x_nchw, (0, 2, 3, 1))
    x = jnp.pad(x, ((0, 0), (0, 0), (0, 0), (0, C - c_in)))
    x = x.reshape(N * H, WC).astype(jnp.float32)

    kernel = functools.partial(_tree_kernel, Nb=Nb, H=H, WC=WC, HPS=HPS)

    def const_spec(shape):
        return pl.BlockSpec(shape, lambda n: (0,) * len(shape))

    # NOTE: constant-index weight blocks could additionally use
    # pipeline_mode=pl.Buffered(1) for VMEM headroom; total VMEM here is <2 MiB
    # so it is left at the default.
    out = pl.pallas_call(
        kernel,
        out_shape=jax.ShapeDtypeStruct((N * H, WC), jnp.float32),
        grid=(grid_steps,),
        in_specs=[
            pl.BlockSpec((Nb * H, WC), lambda n: (n, 0)),    # x (Nb images)
            const_spec((3, WC, WC)),                         # t1c1 banded (bf16)
            const_spec((3, WC, WC)),                         # t1c2 banded
            const_spec((3, WC, WC)),                         # t2c1 banded
            const_spec((3, WC, WC)),                         # t2c2 banded
            const_spec((WC, WC)),                            # project (block-diag)
            const_spec((3 * WC, WC)),                        # fused root weight
            const_spec((6, WC)),                             # biases (f32)
        ],
        out_specs=pl.BlockSpec((Nb * H, WC), lambda n: (n, 0)),
        scratch_shapes=[pltpu.VMEM((Nb * HPS, WC), jnp.bfloat16)],   # halo'd staging
        compiler_params=pltpu.CompilerParams(
            dimension_semantics=("parallel",)),
    )(x, wt1c1, wt1c2, wt2c1, wt2c2, wproj, wroot, biases)

    # planar (N*H, W*C) -> NCHW (kept to preserve the module's NCHW interface)
    return jnp.transpose(out.reshape(N, H, W, C), (0, 3, 1, 2))
    # TODO(synk): rfp_forward / multi-level (levels>1) recursion / stride>1
    # MaxPool branch are not exercised by this levels=1, stride=1 config.


# ----------------------------------------------------------------------------
# Parameters (deterministic synthetic init, BN folded to scale/bias).
# ----------------------------------------------------------------------------
def init_conv_bn(key, K, Cin, Cout):
    k1, k2, k3, k4, k5 = jax.random.split(key, 5)
    w = jax.random.normal(k1, (K, K, Cin, Cout), jnp.float32) / math.sqrt(K * K * Cin)
    gamma = jax.random.uniform(k2, (Cout,), minval=0.5, maxval=1.5)
    beta = jax.random.uniform(k3, (Cout,), minval=-0.2, maxval=0.2)
    mean = jax.random.normal(k4, (Cout,)) * 0.1
    var = jax.random.uniform(k5, (Cout,), minval=0.5, maxval=1.5)
    scale = gamma / jnp.sqrt(var + 1e-5)
    bias = beta - mean * scale
    return w.astype(jnp.float32), scale.astype(jnp.float32), bias.astype(jnp.float32)


def init_tree_params(key, c_in, c_out):
    ks = jax.random.split(key, 6)
    root_dim = 2 * c_out + c_in        # root_dim=0 -> 2*out ; level_root -> +in
    return {
        "proj": init_conv_bn(ks[0], 1, c_in, c_out),      # project: 1x1 conv + BN
        "t1c1": init_conv_bn(ks[1], 3, c_in, c_out),      # tree1 BasicBlock conv1
        "t1c2": init_conv_bn(ks[2], 3, c_out, c_out),     # tree1 BasicBlock conv2
        "t2c1": init_conv_bn(ks[3], 3, c_out, c_out),     # tree2 BasicBlock conv1
        "t2c2": init_conv_bn(ks[4], 3, c_out, c_out),     # tree2 BasicBlock conv2
        "root": init_conv_bn(ks[5], 1, root_dim, c_out),  # Root: 1x1 conv + BN
    }


# ----------------------------------------------------------------------------
# Pure-JAX f32 reference for correctness checking.
# ----------------------------------------------------------------------------
def conv_bn_ref(x, w, scale, bias, *, relu, residual=None):
    y = jax.lax.conv_general_dilated(
        x, w, window_strides=(1, 1), padding="SAME",
        dimension_numbers=("NHWC", "HWIO", "NHWC"))
    y = y * scale + bias
    if residual is not None:
        y = y + residual
    if relu:
        y = jnp.maximum(y, 0.0)
    return y


def tree_forward_ref(x_nchw, p):
    x = jnp.transpose(x_nchw, (0, 2, 3, 1))
    bottom = x
    residual = conv_bn_ref(bottom, *p["proj"], relu=False)
    t = conv_bn_ref(x, *p["t1c1"], relu=True)
    x1 = conv_bn_ref(t, *p["t1c2"], relu=True, residual=residual)
    t = conv_bn_ref(x1, *p["t2c1"], relu=True)
    x2 = conv_bn_ref(t, *p["t2c2"], relu=True, residual=x1)
    cat = jnp.concatenate([x2, x1, bottom], axis=-1)
    out = conv_bn_ref(cat, *p["root"], relu=True, residual=x2)
    return jnp.transpose(out, (0, 3, 1, 2))


if __name__ == "__main__":
    key = jax.random.PRNGKey(0)
    kx, kp = jax.random.split(key)

    N, C_IN, H, W, C_OUT = 2, 4, 16, 16, 8
    x = jax.random.normal(kx, (N, C_IN, H, W), jnp.float32)   # NCHW like PyTorch
    params = init_tree_params(kp, C_IN, C_OUT)

    # One-time weight prep (hoisted out of the per-call forward path).
    prepared = prepare_tree_operands(params, W, C_IN, C_OUT)
    prepared = jax.tree_util.tree_map(jax.block_until_ready, prepared)

    steps = _choose_grid_steps(N)
    fwd = jax.jit(functools.partial(tree_forward, c_out=C_OUT, grid_steps=steps))
    out = jax.block_until_ready(fwd(x, prepared))

    assert out.shape == (N, C_OUT, H, W), out.shape
    ref = tree_forward_ref(x, params)
    # bf16 matmul operands (f32 accumulation + f32 epilogue) -> relaxed tolerance.
    max_err = float(jnp.max(jnp.abs(out - ref)))
    assert bool(jnp.allclose(out, ref, atol=5e-2, rtol=5e-2)), (
        "Pallas Tree output mismatch vs JAX reference, max abs err = %g" % max_err)

    print("KERNEL_OK")
</pallas_src>

<mosaic_0001>
module attributes {stable_mosaic.version = 11 : i64} {
  func.func @_tree_kernel(%arg0: i32, %arg1: memref<32x128xf32, #tpu.memory_space<vmem>>, %arg2: memref<3x128x128xbf16, #tpu.memory_space<vmem>>, %arg3: memref<3x128x128xbf16, #tpu.memory_space<vmem>>, %arg4: memref<3x128x128xbf16, #tpu.memory_space<vmem>>, %arg5: memref<3x128x128xbf16, #tpu.memory_space<vmem>>, %arg6: memref<128x128xbf16, #tpu.memory_space<vmem>>, %arg7: memref<384x128xbf16, #tpu.memory_space<vmem>>, %arg8: memref<6x128xf32, #tpu.memory_space<vmem>>, %arg9: memref<32x128xf32, #tpu.memory_space<vmem>>, %arg10: memref<48x128xbf16, #tpu.memory_space<vmem>>) attributes {dimension_semantics = [#tpu.dimension_semantics<parallel>], iteration_bounds = array<i64: 1>, scalar_prefetch = 0 : i64, scratch_operands = 1 : i64, tpu.core_type = #tpu.core_type<tc>, window_params = [{transform_indices = @transform_0, window_bounds = array<i64: 32, 128>}, {pipeline_mode = #tpu.pipeline_mode<synchronous>, transform_indices = @transform_1, window_bounds = array<i64: 3, 128, 128>}, {pipeline_mode = #tpu.pipeline_mode<synchronous>, transform_indices = @transform_2, window_bounds = array<i64: 3, 128, 128>}, {pipeline_mode = #tpu.pipeline_mode<synchronous>, transform_indices = @transform_3, window_bounds = array<i64: 3, 128, 128>}, {pipeline_mode = #tpu.pipeline_mode<synchronous>, transform_indices = @transform_4, window_bounds = array<i64: 3, 128, 128>}, {pipeline_mode = #tpu.pipeline_mode<synchronous>, transform_indices = @transform_5, window_bounds = array<i64: 128, 128>}, {pipeline_mode = #tpu.pipeline_mode<synchronous>, transform_indices = @transform_6, window_bounds = array<i64: 384, 128>}, {pipeline_mode = #tpu.pipeline_mode<synchronous>, transform_indices = @transform_7, window_bounds = array<i64: 6, 128>}, {transform_indices = @transform_8, window_bounds = array<i64: 32, 128>}]} {
    %cst = arith.constant 0.000000e+00 : bf16
    %0 = vector.broadcast %cst : bf16 to vector<1x128xbf16>
    %c0 = arith.constant 0 : index
    %c0_0 = arith.constant 0 : index
    %1 = vector.load %arg10[%c0, %c0_0] : memref<48x128xbf16, #tpu.memory_space<vmem>>, vector<1x128xbf16>
    tpu.vector_store %arg10[%c0, %c0_0], %0 {strides = array<i32>} : memref<48x128xbf16, #tpu.memory_space<vmem>>, vector<1x128xbf16>,
    %c17 = arith.constant 17 : index
    %c0_1 = arith.constant 0 : index
    %2 = vector.load %arg10[%c17, %c0_1] : memref<48x128xbf16, #tpu.memory_space<vmem>>, vector<1x128xbf16>
    tpu.vector_store %arg10[%c17, %c0_1], %0 {strides = array<i32>} : memref<48x128xbf16, #tpu.memory_space<vmem>>, vector<1x128xbf16>,
    %c24 = arith.constant 24 : index
    %c0_2 = arith.constant 0 : index
    %3 = vector.load %arg10[%c24, %c0_2] : memref<48x128xbf16, #tpu.memory_space<vmem>>, vector<1x128xbf16>
    tpu.vector_store %arg10[%c24, %c0_2], %0 {strides = array<i32>} : memref<48x128xbf16, #tpu.memory_space<vmem>>, vector<1x128xbf16>,
    %c41 = arith.constant 41 : index
    %c0_3 = arith.constant 0 : index
    %4 = vector.load %arg10[%c41, %c0_3] : memref<48x128xbf16, #tpu.memory_space<vmem>>, vector<1x128xbf16>
    tpu.vector_store %arg10[%c41, %c0_3], %0 {strides = array<i32>} : memref<48x128xbf16, #tpu.memory_space<vmem>>, vector<1x128xbf16>,
    %c0_4 = arith.constant 0 : index
    %c0_5 = arith.constant 0 : index
    %5 = vector.load %arg1[%c0_4, %c0_5] : memref<32x128xf32, #tpu.memory_space<vmem>>, vector<32x128xf32>
    %6 = arith.truncf %5 : vector<32x128xf32> to vector<32x128xbf16>
    %c0_6 = arith.constant 0 : index
    %c0_7 = arith.constant 0 : index
    %7 = vector.load %arg8[%c0_6, %c0_7] : memref<6x128xf32, #tpu.memory_space<vmem>>, vector<6x128xf32>
    %c0_8 = arith.constant 0 : index
    %c0_9 = arith.constant 0 : index
    %8 = vector.load %arg6[%c0_8, %c0_9] : memref<128x128xbf16, #tpu.memory_space<vmem>>, vector<128x128xbf16>
    %cst_10 = arith.constant dense<0.000000e+00> : vector<32x128xf32>
    %9 = tpu.matmul %6, %8, %cst_10 {dimension_numbers = #tpu.dot_dimension_numbers<[1], [0], [0], [1], [0, 0, 1, 1], [], []>} : vector<32x128xbf16>, vector<128x128xbf16>, vector<32x128xf32> -> vector<32x128xf32>
    %10 = vector.extract_strided_slice %7 {offsets = [0, 0], sizes = [1, 128], strides = [1, 1]} : vector<6x128xf32> to vector<1x128xf32>
    %11 = vector.broadcast %10 : vector<1x128xf32> to vector<32x128xf32>
    %12 = arith.addf %9, %11 : vector<32x128xf32>
    %13 = vector.extract_strided_slice %7 {offsets = [1, 0], sizes = [1, 128], strides = [1, 1]} : vector<6x128xf32> to vector<1x128xf32>
    %14 = arith.truncf %5 : vector<32x128xf32> to vector<32x128xbf16>
    %c0_11 = arith.constant 0 : index
    %c0_12 = arith.constant 0 : index
    %c0_13 = arith.constant 0 : index
    %15 = vector.load %arg2[%c0_11, %c0_12, %c0_13] : memref<3x128x128xbf16, #tpu.memory_space<vmem>>, vector<1x128x128xbf16>
    %16 = vector.shape_cast %15 : vector<1x128x128xbf16> to vector<128x128xbf16>
    %c1 = arith.constant 1 : index
    %c0_14 = arith.constant 0 : index
    %c0_15 = arith.constant 0 : index
    %17 = vector.load %arg2[%c1, %c0_14, %c0_15] : memref<3x128x128xbf16, #tpu.memory_space<vmem>>, vector<1x128x128xbf16>
    %18 = vector.shape_cast %17 : vector<1x128x128xbf16> to vector<128x128xbf16>
    %c2 = arith.constant 2 : index
    %c0_16 = arith.constant 0 : index
    %c0_17 = arith.constant 0 : index
    %19 = vector.load %arg2[%c2, %c0_16, %c0_17] : memref<3x128x128xbf16, #tpu.memory_space<vmem>>, vector<1x128x128xbf16>
    %20 = vector.shape_cast %19 : vector<1x128x128xbf16> to vector<128x128xbf16>
    %21 = vector.extract_strided_slice %14 {offsets = [0, 0], sizes = [16, 128], strides = [1, 1]} : vector<32x128xbf16> to vector<16x128xbf16>
    %c1_18 = arith.constant 1 : index
    %c0_19 = arith.constant 0 : index
    %22 = vector.load %arg10[%c1_18, %c0_19] : memref<48x128xbf16, #tpu.memory_space<vmem>>, vector<16x128xbf16>
    tpu.vector_store %arg10[%c1_18, %c0_19], %21 {strides = array<i32>} : memref<48x128xbf16, #tpu.memory_space<vmem>>, vector<16x128xbf16>,
    %23 = vector.extract_strided_slice %14 {offsets = [16, 0], sizes = [16, 128], strides = [1, 1]} : vector<32x128xbf16> to vector<16x128xbf16>
    %c25 = arith.constant 25 : index
    %c0_20 = arith.constant 0 : index
    %24 = vector.load %arg10[%c25, %c0_20] : memref<48x128xbf16, #tpu.memory_space<vmem>>, vector<16x128xbf16>
    tpu.vector_store %arg10[%c25, %c0_20], %23 {strides = array<i32>} : memref<48x128xbf16, #tpu.memory_space<vmem>>, vector<16x128xbf16>,
    %c0_21 = arith.constant 0 : index
    %c0_22 = arith.constant 0 : index
    %25 = vector.load %arg10[%c0_21, %c0_22] : memref<48x128xbf16, #tpu.memory_space<vmem>>, vector<16x128xbf16>
    %c2_23 = arith.constant 2 : index
    %c0_24 = arith.constant 0 : index
    %26 = vector.load %arg10[%c2_23, %c0_24] : memref<48x128xbf16, #tpu.memory_space<vmem>>, vector<16x128xbf16>
    %cst_25 = arith.constant dense<0.000000e+00> : vector<16x128xf32>
    %27 = tpu.matmul %25, %16, %cst_25 {dimension_numbers = #tpu.dot_dimension_numbers<[1], [0], [0], [1], [0, 0, 1, 1], [], []>} : vector<16x128xbf16>, vector<128x128xbf16>, vector<16x128xf32> -> vector<16x128xf32>
    %28 = vector.extract_strided_slice %14 {offsets = [0, 0], sizes = [16, 128], strides = [1, 1]} : vector<32x128xbf16> to vector<16x128xbf16>
    %cst_26 = arith.constant dense<0.000000e+00> : vector<16x128xf32>
    %29 = tpu.matmul %28, %18, %cst_26 {dimension_numbers = #tpu.dot_dimension_numbers<[1], [0], [0], [1], [0, 0, 1, 1], [], []>} : vector<16x128xbf16>, vector<128x128xbf16>, vector<16x128xf32> -> vector<16x128xf32>
    %30 = arith.addf %27, %29 : vector<16x128xf32>
    %cst_27 = arith.constant dense<0.000000e+00> : vector<16x128xf32>
    %31 = tpu.matmul %26, %20, %cst_27 {dimension_numbers = #tpu.dot_dimension_numbers<[1], [0], [0], [1], [0, 0, 1, 1], [], []>} : vector<16x128xbf16>, vector<128x128xbf16>, vector<16x128xf32> -> vector<16x128xf32>
    %32 = arith.addf %30, %31 : vector<16x128xf32>
    %c24_28 = arith.constant 24 : index
    %c0_29 = arith.constant 0 : index
    %33 = vector.load %arg10[%c24_28, %c0_29] : memref<48x128xbf16, #tpu.memory_space<vmem>>, vector<16x128xbf16>
    %c26 = arith.constant 26 : index
    %c0_30 = arith.constant 0 : index
    %34 = vector.load %arg10[%c26, %c0_30] : memref<48x128xbf16, #tpu.memory_space<vmem>>, vector<16x128xbf16>
    %cst_31 = arith.constant dense<0.000000e+00> : vector<16x128xf32>
    %35 = tpu.matmul %33, %16, %cst_31 {dimension_numbers = #tpu.dot_dimension_numbers<[1], [0], [0], [1], [0, 0, 1, 1], [], []>} : vector<16x128xbf16>, vector<128x128xbf16>, vector<16x128xf32> -> vector<16x128xf32>
    %36 = vector.extract_strided_slice %14 {offsets = [16, 0], sizes = [16, 128], strides = [1, 1]} : vector<32x128xbf16> to vector<16x128xbf16>
    %cst_32 = arith.constant dense<0.000000e+00> : vector<16x128xf32>
    %37 = tpu.matmul %36, %18, %cst_32 {dimension_numbers = #tpu.dot_dimension_numbers<[1], [0], [0], [1], [0, 0, 1, 1], [], []>} : vector<16x128xbf16>, vector<128x128xbf16>, vector<16x128xf32> -> vector<16x128xf32>
    %38 = arith.addf %35, %37 : vector<16x128xf32>
    %cst_33 = arith.constant dense<0.000000e+00> : vector<16x128xf32>
    %39 = tpu.matmul %34, %20, %cst_33 {dimension_numbers = #tpu.dot_dimension_numbers<[1], [0], [0], [1], [0, 0, 1, 1], [], []>} : vector<16x128xbf16>, vector<128x128xbf16>, vector<16x128xf32> -> vector<16x128xf32>
    %40 = arith.addf %38, %39 : vector<16x128xf32>
    %41 = tpu.concatenate %32, %40 in 0 : vector<16x128xf32>, vector<16x128xf32> -> vector<32x128xf32>
    %42 = vector.broadcast %13 : vector<1x128xf32> to vector<32x128xf32>
    %43 = arith.addf %41, %42 : vector<32x128xf32>
    %cst_34 = arith.constant 0.000000e+00 : f32
    %44 = vector.broadcast %cst_34 : f32 to vector<32x128xf32>
    %45 = arith.maximumf %43, %44 : vector<32x128xf32>
    %46 = vector.extract_strided_slice %7 {offsets = [2, 0], sizes = [1, 128], strides = [1, 1]} : vector<6x128xf32> to vector<1x128xf32>
    %47 = arith.truncf %45 : vector<32x128xf32> to vector<32x128xbf16>
    %c0_35 = arith.constant 0 : index
    %c0_36 = arith.constant 0 : index
    %c0_37 = arith.constant 0 : index
    %48 = vector.load %arg3[%c0_35, %c0_36, %c0_37] : memref<3x128x128xbf16, #tpu.memory_space<vmem>>, vector<1x128x128xbf16>
    %49 = vector.shape_cast %48 : vector<1x128x128xbf16> to vector<128x128xbf16>
    %c1_38 = arith.constant 1 : index
    %c0_39 = arith.constant 0 : index
    %c0_40 = arith.constant 0 : index
    %50 = vector.load %arg3[%c1_38, %c0_39, %c0_40] : memref<3x128x128xbf16, #tpu.memory_space<vmem>>, vector<1x128x128xbf16>
    %51 = vector.shape_cast %50 : vector<1x128x128xbf16> to vector<128x128xbf16>
    %c2_41 = arith.constant 2 : index
    %c0_42 = arith.constant 0 : index
    %c0_43 = arith.constant 0 : index
    %52 = vector.load %arg3[%c2_41, %c0_42, %c0_43] : memref<3x128x128xbf16, #tpu.memory_space<vmem>>, vector<1x128x128xbf16>
    %53 = vector.shape_cast %52 : vector<1x128x128xbf16> to vector<128x128xbf16>
    %54 = vector.extract_strided_slice %47 {offsets = [0, 0], sizes = [16, 128], strides = [1, 1]} : vector<32x128xbf16> to vector<16x128xbf16>
    %c1_44 = arith.constant 1 : index
    %c0_45 = arith.constant 0 : index
    %55 = vector.load %arg10[%c1_44, %c0_45] : memref<48x128xbf16, #tpu.memory_space<vmem>>, vector<16x128xbf16>
    tpu.vector_store %arg10[%c1_44, %c0_45], %54 {strides = array<i32>} : memref<48x128xbf16, #tpu.memory_space<vmem>>, vector<16x128xbf16>,
    %56 = vector.extract_strided_slice %47 {offsets = [16, 0], sizes = [16, 128], strides = [1, 1]} : vector<32x128xbf16> to vector<16x128xbf16>
    %c25_46 = arith.constant 25 : index
    %c0_47 = arith.constant 0 : index
    %57 = vector.load %arg10[%c25_46, %c0_47] : memref<48x128xbf16, #tpu.memory_space<vmem>>, vector<16x128xbf16>
    tpu.vector_store %arg10[%c25_46, %c0_47], %56 {strides = array<i32>} : memref<48x128xbf16, #tpu.memory_space<vmem>>, vector<16x128xbf16>,
    %c0_48 = arith.constant 0 : index
    %c0_49 = arith.constant 0 : index
    %58 = vector.load %arg10[%c0_48, %c0_49] : memref<48x128xbf16, #tpu.memory_space<vmem>>, vector<16x128xbf16>
    %c2_50 = arith.constant 2 : index
    %c0_51 = arith.constant 0 : index
    %59 = vector.load %arg10[%c2_50, %c0_51] : memref<48x128xbf16, #tpu.memory_space<vmem>>, vector<16x128xbf16>
    %cst_52 = arith.constant dense<0.000000e+00> : vector<16x128xf32>
    %60 = tpu.matmul %58, %49, %cst_52 {dimension_numbers = #tpu.dot_dimension_numbers<[1], [0], [0], [1], [0, 0, 1, 1], [], []>} : vector<16x128xbf16>, vector<128x128xbf16>, vector<16x128xf32> -> vector<16x128xf32>
    %61 = vector.extract_strided_slice %47 {offsets = [0, 0], sizes = [16, 128], strides = [1, 1]} : vector<32x128xbf16> to vector<16x128xbf16>
    %cst_53 = arith.constant dense<0.000000e+00> : vector<16x128xf32>
    %62 = tpu.matmul %61, %51, %cst_53 {dimension_numbers = #tpu.dot_dimension_numbers<[1], [0], [0], [1], [0, 0, 1, 1], [], []>} : vector<16x128xbf16>, vector<128x128xbf16>, vector<16x128xf32> -> vector<16x128xf32>
    %63 = arith.addf %60, %62 : vector<16x128xf32>
    %cst_54 = arith.constant dense<0.000000e+00> : vector<16x128xf32>
    %64 = tpu.matmul %59, %53, %cst_54 {dimension_numbers = #tpu.dot_dimension_numbers<[1], [0], [0], [1], [0, 0, 1, 1], [], []>} : vector<16x128xbf16>, vector<128x128xbf16>, vector<16x128xf32> -> vector<16x128xf32>
    %65 = arith.addf %63, %64 : vector<16x128xf32>
    %c24_55 = arith.constant 24 : index
    %c0_56 = arith.constant 0 : index
    %66 = vector.load %arg10[%c24_55, %c0_56] : memref<48x128xbf16, #tpu.memory_space<vmem>>, vector<16x128xbf16>
    %c26_57 = arith.constant 26 : index
    %c0_58 = arith.constant 0 : index
    %67 = vector.load %arg10[%c26_57, %c0_58] : memref<48x128xbf16, #tpu.memory_space<vmem>>, vector<16x128xbf16>
    %cst_59 = arith.constant dense<0.000000e+00> : vector<16x128xf32>
    %68 = tpu.matmul %66, %49, %cst_59 {dimension_numbers = #tpu.dot_dimension_numbers<[1], [0], [0], [1], [0, 0, 1, 1], [], []>} : vector<16x128xbf16>, vector<128x128xbf16>, vector<16x128xf32> -> vector<16x128xf32>
    %69 = vector.extract_strided_slice %47 {offsets = [16, 0], sizes = [16, 128], strides = [1, 1]} : vector<32x128xbf16> to vector<16x128xbf16>
    %cst_60 = arith.constant dense<0.000000e+00> : vector<16x128xf32>
    %70 = tpu.matmul %69, %51, %cst_60 {dimension_numbers = #tpu.dot_dimension_numbers<[1], [0], [0], [1], [0, 0, 1, 1], [], []>} : vector<16x128xbf16>, vector<128x128xbf16>, vector<16x128xf32> -> vector<16x128xf32>
    %71 = arith.addf %68, %70 : vector<16x128xf32>
    %cst_61 = arith.constant dense<0.000000e+00> : vector<16x128xf32>
    %72 = tpu.matmul %67, %53, %cst_61 {dimension_numbers = #tpu.dot_dimension_numbers<[1], [0], [0], [1], [0, 0, 1, 1], [], []>} : vector<16x128xbf16>, vector<128x128xbf16>, vector<16x128xf32> -> vector<16x128xf32>
    %73 = arith.addf %71, %72 : vector<16x128xf32>
    %74 = tpu.concatenate %65, %73 in 0 : vector<16x128xf32>, vector<16x128xf32> -> vector<32x128xf32>
    %75 = vector.broadcast %46 : vector<1x128xf32> to vector<32x128xf32>
    %76 = arith.addf %74, %75 : vector<32x128xf32>
    %77 = arith.addf %76, %12 : vector<32x128xf32>
    %cst_62 = arith.constant 0.000000e+00 : f32
    %78 = vector.broadcast %cst_62 : f32 to vector<32x128xf32>
    %79 = arith.maximumf %77, %78 : vector<32x128xf32>
    %80 = vector.extract_strided_slice %7 {offsets = [3, 0], sizes = [1, 128], strides = [1, 1]} : vector<6x128xf32> to vector<1x128xf32>
    %81 = arith.truncf %79 : vector<32x128xf32> to vector<32x128xbf16>
    %c0_63 = arith.constant 0 : index
    %c0_64 = arith.constant 0 : index
    %c0_65 = arith.constant 0 : index
    %82 = vector.load %arg4[%c0_63, %c0_64, %c0_65] : memref<3x128x128xbf16, #tpu.memory_space<vmem>>, vector<1x128x128xbf16>
    %83 = vector.shape_cast %82 : vector<1x128x128xbf16> to vector<128x128xbf16>
    %c1_66 = arith.constant 1 : index
    %c0_67 = arith.constant 0 : index
    %c0_68 = arith.constant 0 : index
    %84 = vector.load %arg4[%c1_66, %c0_67, %c0_68] : memref<3x128x128xbf16, #tpu.memory_space<vmem>>, vector<1x128x128xbf16>
    %85 = vector.shape_cast %84 : vector<1x128x128xbf16> to vector<128x128xbf16>
    %c2_69 = arith.constant 2 : index
    %c0_70 = arith.constant 0 : index
    %c0_71 = arith.constant 0 : index
    %86 = vector.load %arg4[%c2_69, %c0_70, %c0_71] : memref<3x128x128xbf16, #tpu.memory_space<vmem>>, vector<1x128x128xbf16>
    %87 = vector.shape_cast %86 : vector<1x128x128xbf16> to vector<128x128xbf16>
    %88 = vector.extract_strided_slice %81 {offsets = [0, 0], sizes = [16, 128], strides = [1, 1]} : vector<32x128xbf16> to vector<16x128xbf16>
    %c1_72 = arith.constant 1 : index
    %c0_73 = arith.constant 0 : index
    %89 = vector.load %arg10[%c1_72, %c0_73] : memref<48x128xbf16, #tpu.memory_space<vmem>>, vector<16x128xbf16>
    tpu.vector_store %arg10[%c1_72, %c0_73], %88 {strides = array<i32>} : memref<48x128xbf16, #tpu.memory_space<vmem>>, vector<16x128xbf16>,
    %90 = vector.extract_strided_slice %81 {offsets = [16, 0], sizes = [16, 128], strides = [1, 1]} : vector<32x128xbf16> to vector<16x128xbf16>
    %c25_74 = arith.constant 25 : index
    %c0_75 = arith.constant 0 : index
    %91 = vector.load %arg10[%c25_74, %c0_75] : memref<48x128xbf16, #tpu.memory_space<vmem>>, vector<16x128xbf16>
    tpu.vector_store %arg10[%c25_74, %c0_75], %90 {strides = array<i32>} : memref<48x128xbf16, #tpu.memory_space<vmem>>, vector<16x128xbf16>,
    %c0_76 = arith.constant 0 : index
    %c0_77 = arith.constant 0 : index
    %92 = vector.load %arg10[%c0_76, %c0_77] : memref<48x128xbf16, #tpu.memory_space<vmem>>, vector<16x128xbf16>
    %c2_78 = arith.constant 2 : index
    %c0_79 = arith.constant 0 : index
    %93 = vector.load %arg10[%c2_78, %c0_79] : memref<48x128xbf16, #tpu.memory_space<vmem>>, vector<16x128xbf16>
    %cst_80 = arith.constant dense<0.000000e+00> : vector<16x128xf32>
    %94 = tpu.matmul %92, %83, %cst_80 {dimension_numbers = #tpu.dot_dimension_numbers<[1], [0], [0], [1], [0, 0, 1, 1], [], []>} : vector<16x128xbf16>, vector<128x128xbf16>, vector<16x128xf32> -> vector<16x128xf32>
    %95 = vector.extract_strided_slice %81 {offsets = [0, 0], sizes = [16, 128], strides = [1, 1]} : vector<32x128xbf16> to vector<16x128xbf16>
    %cst_81 = arith.constant dense<0.000000e+00> : vector<16x128xf32>
    %96 = tpu.matmul %95, %85, %cst_81 {dimension_numbers = #tpu.dot_dimension_numbers<[1], [0], [0], [1], [0, 0, 1, 1], [], []>} : vector<16x128xbf16>, vector<128x128xbf16>, vector<16x128xf32> -> vector<16x128xf32>
    %97 = arith.addf %94, %96 : vector<16x128xf32>
    %cst_82 = arith.constant dense<0.000000e+00> : vector<16x128xf32>
    %98 = tpu.matmul %93, %87, %cst_82 {dimension_numbers = #tpu.dot_dimension_numbers<[1], [0], [0], [1], [0, 0, 1, 1], [], []>} : vector<16x128xbf16>, vector<128x128xbf16>, vector<16x128xf32> -> vector<16x128xf32>
    %99 = arith.addf %97, %98 : vector<16x128xf32>
    %c24_83 = arith.constant 24 : index
    %c0_84 = arith.constant 0 : index
    %100 = vector.load %arg10[%c24_83, %c0_84] : memref<48x128xbf16, #tpu.memory_space<vmem>>, vector<16x128xbf16>
    %c26_85 = arith.constant 26 : index
    %c0_86 = arith.constant 0 : index
    %101 = vector.load %arg10[%c26_85, %c0_86] : memref<48x128xbf16, #tpu.memory_space<vmem>>, vector<16x128xbf16>
    %cst_87 = arith.constant dense<0.000000e+00> : vector<16x128xf32>
    %102 = tpu.matmul %100, %83, %cst_87 {dimension_numbers = #tpu.dot_dimension_numbers<[1], [0], [0], [1], [0, 0, 1, 1], [], []>} : vector<16x128xbf16>, vector<128x128xbf16>, vector<16x128xf32> -> vector<16x128xf32>
    %103 = vector.extract_strided_slice %81 {offsets = [16, 0], sizes = [16, 128], strides = [1, 1]} : vector<32x128xbf16> to vector<16x128xbf16>
    %cst_88 = arith.constant dense<0.000000e+00> : vector<16x128xf32>
    %104 = tpu.matmul %103, %85, %cst_88 {dimension_numbers = #tpu.dot_dimension_numbers<[1], [0], [0], [1], [0, 0, 1, 1], [], []>} : vector<16x128xbf16>, vector<128x128xbf16>, vector<16x128xf32> -> vector<16x128xf32>
    %105 = arith.addf %102, %104 : vector<16x128xf32>
    %cst_89 = arith.constant dense<0.000000e+00> : vector<16x128xf32>
    %106 = tpu.matmul %101, %87, %cst_89 {dimension_numbers = #tpu.dot_dimension_numbers<[1], [0], [0], [1], [0, 0, 1, 1], [], []>} : vector<16x128xbf16>, vector<128x128xbf16>, vector<16x128xf32> -> vector<16x128xf32>
    %107 = arith.addf %105, %106 : vector<16x128xf32>
    %108 = tpu.concatenate %99, %107 in 0 : vector<16x128xf32>, vector<16x128xf32> -> vector<32x128xf32>
    %109 = vector.broadcast %80 : vector<1x128xf32> to vector<32x128xf32>
    %110 = arith.addf %108, %109 : vector<32x128xf32>
    %cst_90 = arith.constant 0.000000e+00 : f32
    %111 = vector.broadcast %cst_90 : f32 to vector<32x128xf32>
    %112 = arith.maximumf %110, %111 : vector<32x128xf32>
    %113 = vector.extract_strided_slice %7 {offsets = [4, 0], sizes = [1, 128], strides = [1, 1]} : vector<6x128xf32> to vector<1x128xf32>
    %114 = arith.truncf %112 : vector<32x128xf32> to vector<32x128xbf16>
    %c0_91 = arith.constant 0 : index
    %c0_92 = arith.constant 0 : index
    %c0_93 = arith.constant 0 : index
    %115 = vector.load %arg5[%c0_91, %c0_92, %c0_93] : memref<3x128x128xbf16, #tpu.memory_space<vmem>>, vector<1x128x128xbf16>
    %116 = vector.shape_cast %115 : vector<1x128x128xbf16> to vector<128x128xbf16>
    %c1_94 = arith.constant 1 : index
    %c0_95 = arith.constant 0 : index
    %c0_96 = arith.constant 0 : index
    %117 = vector.load %arg5[%c1_94, %c0_95, %c0_96] : memref<3x128x128xbf16, #tpu.memory_space<vmem>>, vector<1x128x128xbf16>
    %118 = vector.shape_cast %117 : vector<1x128x128xbf16> to vector<128x128xbf16>
    %c2_97 = arith.constant 2 : index
    %c0_98 = arith.constant 0 : index
    %c0_99 = arith.constant 0 : index
    %119 = vector.load %arg5[%c2_97, %c0_98, %c0_99] : memref<3x128x128xbf16, #tpu.memory_space<vmem>>, vector<1x128x128xbf16>
    %120 = vector.shape_cast %119 : vector<1x128x128xbf16> to vector<128x128xbf16>
    %121 = vector.extract_strided_slice %114 {offsets = [0, 0], sizes = [16, 128], strides = [1, 1]} : vector<32x128xbf16> to vector<16x128xbf16>
    %c1_100 = arith.constant 1 : index
    %c0_101 = arith.constant 0 : index
    %122 = vector.load %arg10[%c1_100, %c0_101] : memref<48x128xbf16, #tpu.memory_space<vmem>>, vector<16x128xbf16>
    tpu.vector_store %arg10[%c1_100, %c0_101], %121 {strides = array<i32>} : memref<48x128xbf16, #tpu.memory_space<vmem>>, vector<16x128xbf16>,
    %123 = vector.extract_strided_slice %114 {offsets = [16, 0], sizes = [16, 128], strides = [1, 1]} : vector<32x128xbf16> to vector<16x128xbf16>
    %c25_102 = arith.constant 25 : index
    %c0_103 = arith.constant 0 : index
    %124 = vector.load %arg10[%c25_102, %c0_103] : memref<48x128xbf16, #tpu.memory_space<vmem>>, vector<16x128xbf16>
    tpu.vector_store %arg10[%c25_102, %c0_103], %123 {strides = array<i32>} : memref<48x128xbf16, #tpu.memory_space<vmem>>, vector<16x128xbf16>,
    %c0_104 = arith.constant 0 : index
    %c0_105 = arith.constant 0 : index
    %125 = vector.load %arg10[%c0_104, %c0_105] : memref<48x128xbf16, #tpu.memory_space<vmem>>, vector<16x128xbf16>
    %c2_106 = arith.constant 2 : index
    %c0_107 = arith.constant 0 : index
    %126 = vector.load %arg10[%c2_106, %c0_107] : memref<48x128xbf16, #tpu.memory_space<vmem>>, vector<16x128xbf16>
    %cst_108 = arith.constant dense<0.000000e+00> : vector<16x128xf32>
    %127 = tpu.matmul %125, %116, %cst_108 {dimension_numbers = #tpu.dot_dimension_numbers<[1], [0], [0], [1], [0, 0, 1, 1], [], []>} : vector<16x128xbf16>, vector<128x128xbf16>, vector<16x128xf32> -> vector<16x128xf32>
    %128 = vector.extract_strided_slice %114 {offsets = [0, 0], sizes = [16, 128], strides = [1, 1]} : vector<32x128xbf16> to vector<16x128xbf16>
    %cst_109 = arith.constant dense<0.000000e+00> : vector<16x128xf32>
    %129 = tpu.matmul %128, %118, %cst_109 {dimension_numbers = #tpu.dot_dimension_numbers<[1], [0], [0], [1], [0, 0, 1, 1], [], []>} : vector<16x128xbf16>, vector<128x128xbf16>, vector<16x128xf32> -> vector<16x128xf32>
    %130 = arith.addf %127, %129 : vector<16x128xf32>
    %cst_110 = arith.constant dense<0.000000e+00> : vector<16x128xf32>
    %131 = tpu.matmul %126, %120, %cst_110 {dimension_numbers = #tpu.dot_dimension_numbers<[1], [0], [0], [1], [0, 0, 1, 1], [], []>} : vector<16x128xbf16>, vector<128x128xbf16>, vector<16x128xf32> -> vector<16x128xf32>
    %132 = arith.addf %130, %131 : vector<16x128xf32>
    %c24_111 = arith.constant 24 : index
    %c0_112 = arith.constant 0 : index
    %133 = vector.load %arg10[%c24_111, %c0_112] : memref<48x128xbf16, #tpu.memory_space<vmem>>, vector<16x128xbf16>
    %c26_113 = arith.constant 26 : index
    %c0_114 = arith.constant 0 : index
    %134 = vector.load %arg10[%c26_113, %c0_114] : memref<48x128xbf16, #tpu.memory_space<vmem>>, vector<16x128xbf16>
    %cst_115 = arith.constant dense<0.000000e+00> : vector<16x128xf32>
    %135 = tpu.matmul %133, %116, %cst_115 {dimension_numbers = #tpu.dot_dimension_numbers<[1], [0], [0], [1], [0, 0, 1, 1], [], []>} : vector<16x128xbf16>, vector<128x128xbf16>, vector<16x128xf32> -> vector<16x128xf32>
    %136 = vector.extract_strided_slice %114 {offsets = [16, 0], sizes = [16, 128], strides = [1, 1]} : vector<32x128xbf16> to vector<16x128xbf16>
    %cst_116 = arith.constant dense<0.000000e+00> : vector<16x128xf32>
    %137 = tpu.matmul %136, %118, %cst_116 {dimension_numbers = #tpu.dot_dimension_numbers<[1], [0], [0], [1], [0, 0, 1, 1], [], []>} : vector<16x128xbf16>, vector<128x128xbf16>, vector<16x128xf32> -> vector<16x128xf32>
    %138 = arith.addf %135, %137 : vector<16x128xf32>
    %cst_117 = arith.constant dense<0.000000e+00> : vector<16x128xf32>
    %139 = tpu.matmul %134, %120, %cst_117 {dimension_numbers = #tpu.dot_dimension_numbers<[1], [0], [0], [1], [0, 0, 1, 1], [], []>} : vector<16x128xbf16>, vector<128x128xbf16>, vector<16x128xf32> -> vector<16x128xf32>
    %140 = arith.addf %138, %139 : vector<16x128xf32>
    %141 = tpu.concatenate %132, %140 in 0 : vector<16x128xf32>, vector<16x128xf32> -> vector<32x128xf32>
    %142 = vector.broadcast %113 : vector<1x128xf32> to vector<32x128xf32>
    %143 = arith.addf %141, %142 : vector<32x128xf32>
    %144 = arith.addf %143, %79 : vector<32x128xf32>
    %cst_118 = arith.constant 0.000000e+00 : f32
    %145 = vector.broadcast %cst_118 : f32 to vector<32x128xf32>
    %146 = arith.maximumf %144, %145 : vector<32x128xf32>
    %147 = arith.truncf %146 : vector<32x128xf32> to vector<32x128xbf16>
    %148 = arith.truncf %79 : vector<32x128xf32> to vector<32x128xbf16>
    %149 = tpu.concatenate %147, %148, %6 in 1 : vector<32x128xbf16>, vector<32x128xbf16>, vector<32x128xbf16> -> vector<32x384xbf16>
    %c0_119 = arith.constant 0 : index
    %c0_120 = arith.constant 0 : index
    %150 = vector.load %arg7[%c0_119, %c0_120] : memref<384x128xbf16, #tpu.memory_space<vmem>>, vector<384x128xbf16>
    %cst_121 = arith.constant dense<0.000000e+00> : vector<32x128xf32>
    %151 = tpu.matmul %149, %150, %cst_121 {dimension_numbers = #tpu.dot_dimension_numbers<[1], [0], [0], [1], [0, 0, 1, 1], [], []>} : vector<32x384xbf16>, vector<384x128xbf16>, vector<32x128xf32> -> vector<32x128xf32>
    %152 = vector.extract_strided_slice %7 {offsets = [5, 0], sizes = [1, 128], strides = [1, 1]} : vector<6x128xf32> to vector<1x128xf32>
    %153 = vector.broadcast %152 : vector<1x128xf32> to vector<32x128xf32>
    %154 = arith.addf %151, %153 : vector<32x128xf32>
    %155 = arith.addf %154, %146 : vector<32x128xf32>
    %cst_122 = arith.constant 0.000000e+00 : f32
    %156 = vector.broadcast %cst_122 : f32 to vector<32x128xf32>
    %157 = arith.maximumf %155, %156 : vector<32x128xf32>
    %c0_123 = arith.constant 0 : index
    %c0_124 = arith.constant 0 : index
    %158 = vector.load %arg9[%c0_123, %c0_124] : memref<32x128xf32, #tpu.memory_space<vmem>>, vector<32x128xf32>
    tpu.vector_store %arg9[%c0_123, %c0_124], %157 {strides = array<i32>} : memref<32x128xf32, #tpu.memory_space<vmem>>, vector<32x128xf32>,
    return
  }
  func.func @transform_0(%arg0: i32) -> (i32, i32) {
    %c0_i32 = arith.constant 0 : i32
    %c0_i32_0 = arith.constant 0 : i32
    return %arg0, %c0_i32 : i32, i32
  }
  func.func @transform_1(%arg0: i32) -> (i32, i32, i32) {
    %c0_i32 = arith.constant 0 : i32
    %c0_i32_0 = arith.constant 0 : i32
    %c0_i32_1 = arith.constant 0 : i32
    %c0_i32_2 = arith.constant 0 : i32
    return %c0_i32, %c0_i32_0, %c0_i32_1 : i32, i32, i32
  }
  func.func @transform_2(%arg0: i32) -> (i32, i32, i32) {
    %c0_i32 = arith.constant 0 : i32
    %c0_i32_0 = arith.constant 0 : i32
    %c0_i32_1 = arith.constant 0 : i32
    %c0_i32_2 = arith.constant 0 : i32
    return %c0_i32, %c0_i32_0, %c0_i32_1 : i32, i32, i32
  }
  func.func @transform_3(%arg0: i32) -> (i32, i32, i32) {
    %c0_i32 = arith.constant 0 : i32
    %c0_i32_0 = arith.constant 0 : i32
    %c0_i32_1 = arith.constant 0 : i32
    %c0_i32_2 = arith.constant 0 : i32
    return %c0_i32, %c0_i32_0, %c0_i32_1 : i32, i32, i32
  }
  func.func @transform_4(%arg0: i32) -> (i32, i32, i32) {
    %c0_i32 = arith.constant 0 : i32
    %c0_i32_0 = arith.constant 0 : i32
    %c0_i32_1 = arith.constant 0 : i32
    %c0_i32_2 = arith.constant 0 : i32
    return %c0_i32, %c0_i32_0, %c0_i32_1 : i32, i32, i32
  }
  func.func @transform_5(%arg0: i32) -> (i32, i32) {
    %c0_i32 = arith.constant 0 : i32
    %c0_i32_0 = arith.constant 0 : i32
    %c0_i32_1 = arith.constant 0 : i32
    return %c0_i32, %c0_i32_0 : i32, i32
  }
  func.func @transform_6(%arg0: i32) -> (i32, i32) {
    %c0_i32 = arith.constant 0 : i32
    %c0_i32_0 = arith.constant 0 : i32
    %c0_i32_1 = arith.constant 0 : i32
    return %c0_i32, %c0_i32_0 : i32, i32
  }
  func.func @transform_7(%arg0: i32) -> (i32, i32) {
    %c0_i32 = arith.constant 0 : i32
    %c0_i32_0 = arith.constant 0 : i32
    %c0_i32_1 = arith.constant 0 : i32
    return %c0_i32, %c0_i32_0 : i32, i32
  }
  func.func @transform_8(%arg0: i32) -> (i32, i32) {
    %c0_i32 = arith.constant 0 : i32
    %c0_i32_0 = arith.constant 0 : i32
    return %arg0, %c0_i32 : i32, i32
  }
}

</mosaic_0001>

<llo_original>
// kernel: tree_forward.1
$region0: #{tree_forward.1}
  #allocation0 [shape = 'u32[]', space=smem, size = 0x4, offset = 0x4, fixed_abs, tag = 'smem constant byte address 0x4 - core index']
  #allocation1 [shape = 'u32[144,128]{1,0:T(1,128)}', space=vmem, size = 0x12000, scoped, tag = 'internal scratch']
  #allocation2 [shape = 'bf16[48,128]{1,0:T(16,128)(2,1)}', space=vmem, size = 0x3000, scoped, tag = 'scratch operand']
  %s0 = inlined_call_operand.vmem [shape: f32[32,128], index: 0, kind: input, shape index: {}]
  %s1 = inlined_call_operand.vmem [shape: bf16[3,128,128], index: 1, kind: input, shape index: {}]
  %s2 = inlined_call_operand.vmem [shape: bf16[3,128,128], index: 2, kind: input, shape index: {}]
  %s3 = inlined_call_operand.vmem [shape: bf16[3,128,128], index: 3, kind: input, shape index: {}]
  %s4 = inlined_call_operand.vmem [shape: bf16[3,128,128], index: 4, kind: input, shape index: {}]
  %s5 = inlined_call_operand.vmem [shape: bf16[128,128], index: 5, kind: input, shape index: {}]
  %s6 = inlined_call_operand.vmem [shape: bf16[384,128], index: 6, kind: input, shape index: {}]
  %s7 = inlined_call_operand.vmem [shape: f32[6,128], index: 7, kind: input, shape index: {}]
  %s8 = inlined_call_operand.vmem [shape: f32[32,128], index: 8, kind: output, shape index: {}]
  %s9 = sld [smem:[#allocation0]]
  $region42: #{tree_forward.1} parent=0
    _
  %s11 = ssub.s32 1, %s9
  %s12 = scalar_select 0, %s11, %s9
  // Predicated region
  $region2: #{tree_forward.1} parent=0 // pred_check
    _
  $region3: #{tree_forward.1} parent=0 // pred_check_branch
    %14 = sbr.rel (0) target = $region5
  $region4: #{tree_forward.1} parent=0 // pred_region
    _
  $region5: #{tree_forward.1} parent=0 // pred_fallthru
    _
  // Predicated region
  $region6: #{tree_forward.1} parent=0 // pred_check
    _
  $region7: #{tree_forward.1} parent=0 // pred_check_branch
    %16 = sbr.rel (0) target = $region9
  $region8: #{tree_forward.1} parent=0 // pred_region
    _
  $region9: #{tree_forward.1} parent=0 // pred_fallthru
    _
  // Predicated region
  $region10: #{tree_forward.1} parent=0 // pred_check
    _
  $region11: #{tree_forward.1} parent=0 // pred_check_branch
    %18 = sbr.rel (0) target = $region13
  $region12: #{tree_forward.1} parent=0 // pred_region
    _
  $region13: #{tree_forward.1} parent=0 // pred_fallthru
    _
  // Predicated region
  $region14: #{tree_forward.1} parent=0 // pred_check
    _
  $region15: #{tree_forward.1} parent=0 // pred_check_branch
    %20 = sbr.rel (0) target = $region17
  $region16: #{tree_forward.1} parent=0 // pred_region
    _
  $region17: #{tree_forward.1} parent=0 // pred_fallthru
    _
  // Predicated region
  $region18: #{tree_forward.1} parent=0 // pred_check
    _
  $region19: #{tree_forward.1} parent=0 // pred_check_branch
    %22 = sbr.rel (0) target = $region21
  $region20: #{tree_forward.1} parent=0 // pred_region
    _
  $region21: #{tree_forward.1} parent=0 // pred_fallthru
    _
  // Predicated region
  $region22: #{tree_forward.1} parent=0 // pred_check
    _
  $region23: #{tree_forward.1} parent=0 // pred_check_branch
    %24 = sbr.rel (0) target = $region25
  $region24: #{tree_forward.1} parent=0 // pred_region
    _
  $region25: #{tree_forward.1} parent=0 // pred_fallthru
    _
  // Predicated region
  $region26: #{tree_forward.1} parent=0 // pred_check
    _
  $region27: #{tree_forward.1} parent=0 // pred_check_branch
    %26 = sbr.rel (0) target = $region29
  $region28: #{tree_forward.1} parent=0 // pred_region
    _
  $region29: #{tree_forward.1} parent=0 // pred_fallthru
    _
  // Predicated region
  $region30: #{tree_forward.1} parent=0 // pred_check
    _
  $region31: #{tree_forward.1} parent=0 // pred_check_branch
    %28 = sbr.rel (0) target = $region33
  $region32: #{tree_forward.1} parent=0 // pred_region
    _
  $region33: #{tree_forward.1} parent=0 // pred_fallthru
    _
  %vm30 = vcmask 1040384
  %vm31 = vsmask.f32 256
  %vm32 = vmand %vm30, %vm31
  %v33 = vld [vmem:[#allocation2] sm:$0x1]
  %v34 = vsel %vm32, 0, %v33
  %35 = vst [vmem:[#allocation2] sm:$0x1] %v34
  %vm36 = vsmask.f32 7938
  %vm37 = vmand %vm30, %vm36
  %v38 = vld [vmem:[#allocation2 + $0x8] sm:$0x1]
  %v39 = vsel %vm37, 0, %v38
  %40 = vst [vmem:[#allocation2 + $0x8] sm:$0x1] %v39
  %vm41 = vcmask 1044484
  %vm42 = vsmask.f32 4352
  %vm43 = vmand %vm41, %vm42
  %v44 = vld [vmem:[#allocation2 + $0x8] sm:$0x10]
  %v45 = vsel %vm43, 0, %v44
  %46 = vst [vmem:[#allocation2 + $0x8] sm:$0x10] %v45
  %vm47 = vsmask.f32 7954
  %vm48 = vmand %vm41, %vm47
  %v49 = vld [vmem:[#allocation2 + $0x10] sm:$0x10]
  %v50 = vsel %vm48, 0, %v49
  %51 = vst [vmem:[#allocation2 + $0x10] sm:$0x10] %v50
  %v52 = vld [vmem:[%s0] sm:$0xff]
  %v53 = vld [vmem:[%s0 + $0x8] sm:$0xff]
  %v54 = vld [vmem:[%s0 + $0x10] sm:$0xff]
  %v55 = vld [vmem:[%s0 + $0x18] sm:$0xff]
  %v56 = vpack.c.bf16 %v53, %v52
  %v57 = vpack.c.bf16 %v55, %v54
  %v58 = vld [vmem:[%s7] sm:$0x3f]
  %v59 = vld [vmem:[%s5] sm:$0xf]
  %v60 = vld [vmem:[%s5 + $0x4] sm:$0xf]
  %v61 = vld [vmem:[%s5 + $0x8] sm:$0xf]
  %v62 = vld [vmem:[%s5 + $0xc] sm:$0xf]
  %v63 = vld [vmem:[%s5 + $0x10] sm:$0xf]
  %v64 = vld [vmem:[%s5 + $0x14] sm:$0xf]
  %v65 = vld [vmem:[%s5 + $0x18] sm:$0xf]
  %v66 = vld [vmem:[%s5 + $0x1c] sm:$0xf]
  %v67 = vld [vmem:[%s5 + $0x20] sm:$0xf]
  %v68 = vld [vmem:[%s5 + $0x24] sm:$0xf]
  %v69 = vld [vmem:[%s5 + $0x28] sm:$0xf]
  %v70 = vld [vmem:[%s5 + $0x2c] sm:$0xf]
  %v71 = vld [vmem:[%s5 + $0x30] sm:$0xf]
  %v72 = vld [vmem:[%s5 + $0x34] sm:$0xf]
  %v73 = vld [vmem:[%s5 + $0x38] sm:$0xf]
  %v74 = vld [vmem:[%s5 + $0x3c] sm:$0xf]
  %v75 = vlaneseq
  %v76 = vshrl.u32 %v75, 7
  %v77 = vsub.s32 0, %v76
  %v78 = vrot.slane %v58, %v77
  %v95 = vunpack.c.l.b16 %v59
  %v96 = vunpack.c.l.b16 %v60
  %v97 = vunpack.c.l.b16 %v61
  %v98 = vunpack.c.l.b16 %v62
  %v99 = vunpack.c.l.b16 %v63
  %v100 = vunpack.c.l.b16 %v64
  %v101 = vunpack.c.l.b16 %v65
  %v102 = vunpack.c.l.b16 %v66
  %v103 = vunpack.c.l.b16 %v67
  %v104 = vunpack.c.l.b16 %v68
  %v105 = vunpack.c.l.b16 %v69
  %v106 = vunpack.c.l.b16 %v70
  %v107 = vunpack.c.l.b16 %v71
  %v108 = vunpack.c.l.b16 %v72
  %v109 = vunpack.c.l.b16 %v73
  %v110 = vunpack.c.l.b16 %v74
  %v111 = vpack.c.b16 %v96, %v95
  %v112 = vpack.c.b16 %v98, %v97
  %v113 = vpack.c.b16 %v100, %v99
  %v114 = vpack.c.b16 %v102, %v101
  %v115 = vpack.c.b16 %v104, %v103
  %v116 = vpack.c.b16 %v106, %v105
  %v117 = vpack.c.b16 %v108, %v107
  %v118 = vpack.c.b16 %v110, %v109
  %127 = vmatprep.subr.bf16.mxu0 0
  %128 = vmatpush1.bf16.msra.mxu0 %v111
  %129 = vmatprep.subr.bf16.mxu0 0
  %130 = vmatpush1.bf16.msra.mxu0 %v112
  %131 = vmatprep.subr.bf16.mxu0 0
  %132 = vmatpush1.bf16.msra.mxu0 %v113
  %133 = vmatprep.subr.bf16.mxu0 0
  %134 = vmatpush1.bf16.msra.mxu0 %v114
  %135 = vmatprep.subr.bf16.mxu0 0
  %136 = vmatpush1.bf16.msra.mxu0 %v115
  %137 = vmatprep.subr.bf16.mxu0 0
  %138 = vmatpush1.bf16.msra.mxu0 %v116
  %139 = vmatprep.subr.bf16.mxu0 0
  %140 = vmatpush1.bf16.msra.mxu0 %v117
  %141 = vmatprep.subr.bf16.mxu0 0
  %142 = vmatpush1.bf16.msra.mxu0 %v118
  %143 = vmatprep.subr.bf16.mxu0 0
  %144 = vmatpush1.bf16.msra.mxu0 0
  %145 = vmatprep.subr.bf16.mxu0 0
  %146 = vmatpush1.bf16.msra.mxu0 0
  %147 = vmatprep.subr.bf16.mxu0 0
  %148 = vmatpush1.bf16.msra.mxu0 0
  %149 = vmatprep.subr.bf16.mxu0 0
  %150 = vmatpush1.bf16.msra.mxu0 0
  %151 = vmatprep.subr.bf16.mxu0 0
  %152 = vmatpush1.bf16.msra.mxu0 0
  %153 = vmatprep.subr.bf16.mxu0 0
  %154 = vmatpush1.bf16.msra.mxu0 0
  %155 = vmatprep.subr.bf16.mxu0 0
  %156 = vmatpush1.bf16.msra.mxu0 0
  %157 = vmatprep.subr.bf16.mxu0 0
  %158 = vmatpush1.bf16.msra.mxu0 0
  %159 = vmatprep.mubr.bf16.mxu0 0
  %160 = vmatmul.mubr.bf16.gmra.mrb[0].mxu0 %v56
  %v161 = vpop.f32.mrb[0].mxu0
  %v162 = vadd.f32 %v78, %v161
  %v163 = vpop.f32.mrb[0].mxu0
  %v164 = vpop.f32.mrb[0].mxu0
  %v165 = vadd.f32 %v78, %v164
  %v166 = vpop.f32.mrb[0].mxu0
  %167 = vmatprep.mubr.bf16.mxu0 0
  %168 = vmatmul.mubr.bf16.gmra.mrb[0].mxu0 %v57
  %v169 = vpop.f32.mrb[0].mxu0
  %v170 = vadd.f32 %v78, %v169
  %v171 = vpop.f32.mrb[0].mxu0
  %v172 = vpop.f32.mrb[0].mxu0
  %v173 = vadd.f32 %v78, %v172
  %v174 = vpop.f32.mrb[0].mxu0
  %175 = vdwg.mxu0
  %v176 = vld [vmem:[%s1] sm:$0xf]
  %v177 = vld [vmem:[%s1 + $0x4] sm:$0xf]
  %v178 = vld [vmem:[%s1 + $0x8] sm:$0xf]
  %v179 = vld [vmem:[%s1 + $0xc] sm:$0xf]
  %v180 = vld [vmem:[%s1 + $0x10] sm:$0xf]
  %v181 = vld [vmem:[%s1 + $0x14] sm:$0xf]
  %v182 = vld [vmem:[%s1 + $0x18] sm:$0xf]
  %v183 = vld [vmem:[%s1 + $0x1c] sm:$0xf]
  %v184 = vld [vmem:[%s1 + $0x20] sm:$0xf]
  %v185 = vld [vmem:[%s1 + $0x24] sm:$0xf]
  %v186 = vld [vmem:[%s1 + $0x28] sm:$0xf]
  %v187 = vld [vmem:[%s1 + $0x2c] sm:$0xf]
  %v188 = vld [vmem:[%s1 + $0x30] sm:$0xf]
  %v189 = vld [vmem:[%s1 + $0x34] sm:$0xf]
  %v190 = vld [vmem:[%s1 + $0x38] sm:$0xf]
  %v191 = vld [vmem:[%s1 + $0x3c] sm:$0xf]
  %s192 = scalar_lea.vmem %s1, 64
  %v193 = vld [vmem:[%s192] sm:$0xf]
  %v194 = vld [vmem:[%s192 + $0x4] sm:$0xf]
  %v195 = vld [vmem:[%s192 + $0x8] sm:$0xf]
  %v196 = vld [vmem:[%s192 + $0xc] sm:$0xf]
  %v197 = vld [vmem:[%s192 + $0x10] sm:$0xf]
  %v198 = vld [vmem:[%s192 + $0x14] sm:$0xf]
  %v199 = vld [vmem:[%s192 + $0x18] sm:$0xf]
  %v200 = vld [vmem:[%s192 + $0x1c] sm:$0xf]
  %v201 = vld [vmem:[%s192 + $0x20] sm:$0xf]
  %v202 = vld [vmem:[%s192 + $0x24] sm:$0xf]
  %v203 = vld [vmem:[%s192 + $0x28] sm:$0xf]
  %v204 = vld [vmem:[%s192 + $0x2c] sm:$0xf]
  %v205 = vld [vmem:[%s192 + $0x30] sm:$0xf]
  %v206 = vld [vmem:[%s192 + $0x34] sm:$0xf]
  %v207 = vld [vmem:[%s192 + $0x38] sm:$0xf]
  %v208 = vld [vmem:[%s192 + $0x3c] sm:$0xf]
  %s209 = scalar_lea.vmem %s1, 128
  %v210 = vld [vmem:[%s209] sm:$0xf]
  %v211 = vld [vmem:[%s209 + $0x4] sm:$0xf]
  %v212 = vld [vmem:[%s209 + $0x8] sm:$0xf]
  %v213 = vld [vmem:[%s209 + $0xc] sm:$0xf]
  %v214 = vld [vmem:[%s209 + $0x10] sm:$0xf]
  %v215 = vld [vmem:[%s209 + $0x14] sm:$0xf]
  %v216 = vld [vmem:[%s209 + $0x18] sm:$0xf]
  %v217 = vld [vmem:[%s209 + $0x1c] sm:$0xf]
  %v218 = vld [vmem:[%s209 + $0x20] sm:$0xf]
  %v219 = vld [vmem:[%s209 + $0x24] sm:$0xf]
  %v220 = vld [vmem:[%s209 + $0x28] sm:$0xf]
  %v221 = vld [vmem:[%s209 + $0x2c] sm:$0xf]
  %v222 = vld [vmem:[%s209 + $0x30] sm:$0xf]
  %v223 = vld [vmem:[%s209 + $0x34] sm:$0xf]
  %v224 = vld [vmem:[%s209 + $0x38] sm:$0xf]
  %v225 = vld [vmem:[%s209 + $0x3c] sm:$0xf]
  %v227 = vshrl.u32 %v56, 16
  %v229 = vrot.slane %v227, 7
  %v230 = vshll.u32 %v56, 16
  %v232 = vor.u32 %v229, %v230
  %vm235 = vcmask 1047552
  %vm236 = vmand %vm235, %vm36
  %v237 = vld [vmem:[#allocation2] sm:$0xff]
  %v238 = vsel %vm236, %v232, %v237
  %239 = vst [vmem:[#allocation2] sm:$0xff] %v238
  %v240 = vld [vmem:[#allocation2 + $0x8] sm:$0x1]
  %v241 = vsel %vm32, %v229, %v240
  %242 = vst [vmem:[#allocation2 + $0x8] sm:$0x1] %v241
  %v244 = vshrl.u32 %v57, 16
  %v246 = vrot.slane %v244, 3
  %v247 = vshll.u32 %v57, 16
  %v249 = vrot.slane %v247, 4
  %v250 = vor.u32 %v246, %v249
  %vm252 = vcmask 1047556
  %vm253 = vmand %vm252, %vm47
  %v254 = vld [vmem:[#allocation2 + $0x8] sm:$0xf0]
  %v255 = vsel %vm253, %v250, %v254
  %256 = vst [vmem:[#allocation2 + $0x8] sm:$0xf0] %v255
  %vm257 = vcmask 1044480
  %vm258 = vmand %vm257, %vm42
  %v259 = vld [vmem:[#allocation2 + $0x10] sm:$0x1f]
  %v260 = vsel %vm258, %v250, %v259
  %261 = vst [vmem:[#allocation2 + $0x10] sm:$0x1f] %v260
  %v262 = vld [vmem:[#allocation2] sm:$0xff]
  %v263 = vld [vmem:[#allocation2] sm:$0xfe]
  %v264 = vld [vmem:[#allocation2 + $0x8] sm:$0x1]
  %v281 = vunpack.c.l.b16 %v193
  %v282 = vunpack.c.l.b16 %v194
  %v283 = vunpack.c.l.b16 %v195
  %v284 = vunpack.c.l.b16 %v196
  %v285 = vunpack.c.l.b16 %v197
  %v286 = vunpack.c.l.b16 %v198
  %v287 = vunpack.c.l.b16 %v199
  %v288 = vunpack.c.l.b16 %v200
  %v289 = vunpack.c.l.b16 %v201
  %v290 = vunpack.c.l.b16 %v202
  %v291 = vunpack.c.l.b16 %v203
  %v292 = vunpack.c.l.b16 %v204
  %v293 = vunpack.c.l.b16 %v205
  %v294 = vunpack.c.l.b16 %v206
  %v295 = vunpack.c.l.b16 %v207
  %v296 = vunpack.c.l.b16 %v208
  %v297 = vpack.c.b16 %v282, %v281
  %v298 = vpack.c.b16 %v284, %v283
  %v299 = vpack.c.b16 %v286, %v285
  %v300 = vpack.c.b16 %v288, %v287
  %v301 = vpack.c.b16 %v290, %v289
  %v302 = vpack.c.b16 %v292, %v291
  %v303 = vpack.c.b16 %v294, %v293
  %v304 = vpack.c.b16 %v296, %v295
  %313 = vmatprep.subr.bf16.mxu0 0
  %314 = vmatpush1.bf16.msra.mxu0 %v297
  %315 = vmatprep.subr.bf16.mxu0 0
  %316 = vmatpush1.bf16.msra.mxu0 %v298
  %317 = vmatprep.subr.bf16.mxu0 0
  %318 = vmatpush1.bf16.msra.mxu0 %v299
  %319 = vmatprep.subr.bf16.mxu0 0
  %320 = vmatpush1.bf16.msra.mxu0 %v300
  %321 = vmatprep.subr.bf16.mxu0 0
  %322 = vmatpush1.bf16.msra.mxu0 %v301
  %323 = vmatprep.subr.bf16.mxu0 0
  %324 = vmatpush1.bf16.msra.mxu0 %v302
  %325 = vmatprep.subr.bf16.mxu0 0
  %326 = vmatpush1.bf16.msra.mxu0 %v303
  %327 = vmatprep.subr.bf16.mxu0 0
  %328 = vmatpush1.bf16.msra.mxu0 %v304
  %329 = vmatprep.subr.bf16.mxu0 0
  %330 = vmatpush1.bf16.msra.mxu0 0
  %331 = vmatprep.subr.bf16.mxu0 0
  %332 = vmatpush1.bf16.msra.mxu0 0
  %333 = vmatprep.subr.bf16.mxu0 0
  %334 = vmatpush1.bf16.msra.mxu0 0
  %335 = vmatprep.subr.bf16.mxu0 0
  %336 = vmatpush1.bf16.msra.mxu0 0
  %337 = vmatprep.subr.bf16.mxu0 0
  %338 = vmatpush1.bf16.msra.mxu0 0
  %339 = vmatprep.subr.bf16.mxu0 0
  %340 = vmatpush1.bf16.msra.mxu0 0
  %341 = vmatprep.subr.bf16.mxu0 0
  %342 = vmatpush1.bf16.msra.mxu0 0
  %343 = vmatprep.subr.bf16.mxu0 0
  %344 = vmatpush1.bf16.msra.mxu0 0
  %345 = vmatprep.mubr.bf16.mxu0 0
  %346 = vmatmul.mubr.bf16.gmra.mrb[0].mxu0 %v56
  %v347 = vpop.f32.mrb[0].mxu0
  %v348 = vadd.f32 0.0, %v347
  %v349 = vpop.f32.mrb[0].mxu0
  %v350 = vpop.f32.mrb[0].mxu0
  %v351 = vadd.f32 0.0, %v350
  %v352 = vpop.f32.mrb[0].mxu0
  %353 = vdwg.mxu0
  %v370 = vunpack.c.l.b16 %v176
  %v371 = vunpack.c.l.b16 %v177
  %v372 = vunpack.c.l.b16 %v178
  %v373 = vunpack.c.l.b16 %v179
  %v374 = vunpack.c.l.b16 %v180
  %v375 = vunpack.c.l.b16 %v181
  %v376 = vunpack.c.l.b16 %v182
  %v377 = vunpack.c.l.b16 %v183
  %v378 = vunpack.c.l.b16 %v184
  %v379 = vunpack.c.l.b16 %v185
  %v380 = vunpack.c.l.b16 %v186
  %v381 = vunpack.c.l.b16 %v187
  %v382 = vunpack.c.l.b16 %v188
  %v383 = vunpack.c.l.b16 %v189
  %v384 = vunpack.c.l.b16 %v190
  %v385 = vunpack.c.l.b16 %v191
  %v386 = vpack.c.b16 %v371, %v370
  %v387 = vpack.c.b16 %v373, %v372
  %v388 = vpack.c.b16 %v375, %v374
  %v389 = vpack.c.b16 %v377, %v376
  %v390 = vpack.c.b16 %v379, %v378
  %v391 = vpack.c.b16 %v381, %v380
  %v392 = vpack.c.b16 %v383, %v382
  %v393 = vpack.c.b16 %v385, %v384
  %402 = vmatprep.subr.bf16.mxu0 0
  %403 = vmatpush1.bf16.msra.mxu0 %v386
  %404 = vmatprep.subr.bf16.mxu0 0
  %405 = vmatpush1.bf16.msra.mxu0 %v387
  %406 = vmatprep.subr.bf16.mxu0 0
  %407 = vmatpush1.bf16.msra.mxu0 %v388
  %408 = vmatprep.subr.bf16.mxu0 0
  %409 = vmatpush1.bf16.msra.mxu0 %v389
  %410 = vmatprep.subr.bf16.mxu0 0
  %411 = vmatpush1.bf16.msra.mxu0 %v390
  %412 = vmatprep.subr.bf16.mxu0 0
  %413 = vmatpush1.bf16.msra.mxu0 %v391
  %414 = vmatprep.subr.bf16.mxu0 0
  %415 = vmatpush1.bf16.msra.mxu0 %v392
  %416 = vmatprep.subr.bf16.mxu0 0
  %417 = vmatpush1.bf16.msra.mxu0 %v393
  %418 = vmatprep.subr.bf16.mxu0 0
  %419 = vmatpush1.bf16.msra.mxu0 0
  %420 = vmatprep.subr.bf16.mxu0 0
  %421 = vmatpush1.bf16.msra.mxu0 0
  %422 = vmatprep.subr.bf16.mxu0 0
  %423 = vmatpush1.bf16.msra.mxu0 0
  %424 = vmatprep.subr.bf16.mxu0 0
  %425 = vmatpush1.bf16.msra.mxu0 0
  %426 = vmatprep.subr.bf16.mxu0 0
  %427 = vmatpush1.bf16.msra.mxu0 0
  %428 = vmatprep.subr.bf16.mxu0 0
  %429 = vmatpush1.bf16.msra.mxu0 0
  %430 = vmatprep.subr.bf16.mxu0 0
  %431 = vmatpush1.bf16.msra.mxu0 0
  %432 = vmatprep.subr.bf16.mxu0 0
  %433 = vmatpush1.bf16.msra.mxu0 0
  %434 = vmatprep.mubr.bf16.mxu0 0
  %435 = vmatmul.mubr.bf16.gmra.mrb[0].mxu0 %v262
  %v436 = vpop.f32.mrb[0].mxu0
  %v437 = vadd.f32 %v348, %v436
  %v438 = vpop.f32.mrb[0].mxu0
  %v439 = vpop.f32.mrb[0].mxu0
  %v440 = vadd.f32 %v351, %v439
  %v441 = vpop.f32.mrb[0].mxu0
  %442 = vdwg.mxu0
  %vm445 = vcmask 1046528
  %v446 = vrot.slane %v263, 1
  %v447 = vrot.slane %v264, 1
  %v448 = vsel %vm445, %v446, %v447
  %v466 = vunpack.c.l.b16 %v210
  %v467 = vunpack.c.l.b16 %v211
  %v468 = vunpack.c.l.b16 %v212
  %v469 = vunpack.c.l.b16 %v213
  %v470 = vunpack.c.l.b16 %v214
  %v471 = vunpack.c.l.b16 %v215
  %v472 = vunpack.c.l.b16 %v216
  %v473 = vunpack.c.l.b16 %v217
  %v474 = vunpack.c.l.b16 %v218
  %v475 = vunpack.c.l.b16 %v219
  %v476 = vunpack.c.l.b16 %v220
  %v477 = vunpack.c.l.b16 %v221
  %v478 = vunpack.c.l.b16 %v222
  %v479 = vunpack.c.l.b16 %v223
  %v480 = vunpack.c.l.b16 %v224
  %v481 = vunpack.c.l.b16 %v225
  %v482 = vpack.c.b16 %v467, %v466
  %v483 = vpack.c.b16 %v469, %v468
  %v484 = vpack.c.b16 %v471, %v470
  %v485 = vpack.c.b16 %v473, %v472
  %v486 = vpack.c.b16 %v475, %v474
  %v487 = vpack.c.b16 %v477, %v476
  %v488 = vpack.c.b16 %v479, %v478
  %v489 = vpack.c.b16 %v481, %v480
  %498 = vmatprep.subr.bf16.mxu0 0
  %499 = vmatpush1.bf16.msra.mxu0 %v482
  %500 = vmatprep.subr.bf16.mxu0 0
  %501 = vmatpush1.bf16.msra.mxu0 %v483
  %502 = vmatprep.subr.bf16.mxu0 0
  %503 = vmatpush1.bf16.msra.mxu0 %v484
  %504 = vmatprep.subr.bf16.mxu0 0
  %505 = vmatpush1.bf16.msra.mxu0 %v485
  %506 = vmatprep.subr.bf16.mxu0 0
  %507 = vmatpush1.bf16.msra.mxu0 %v486
  %508 = vmatprep.subr.bf16.mxu0 0
  %509 = vmatpush1.bf16.msra.mxu0 %v487
  %510 = vmatprep.subr.bf16.mxu0 0
  %511 = vmatpush1.bf16.msra.mxu0 %v488
  %512 = vmatprep.subr.bf16.mxu0 0
  %513 = vmatpush1.bf16.msra.mxu0 %v489
  %514 = vmatprep.subr.bf16.mxu0 0
  %515 = vmatpush1.bf16.msra.mxu0 0
  %516 = vmatprep.subr.bf16.mxu0 0
  %517 = vmatpush1.bf16.msra.mxu0 0
  %518 = vmatprep.subr.bf16.mxu0 0
  %519 = vmatpush1.bf16.msra.mxu0 0
  %520 = vmatprep.subr.bf16.mxu0 0
  %521 = vmatpush1.bf16.msra.mxu0 0
  %522 = vmatprep.subr.bf16.mxu0 0
  %523 = vmatpush1.bf16.msra.mxu0 0
  %524 = vmatprep.subr.bf16.mxu0 0
  %525 = vmatpush1.bf16.msra.mxu0 0
  %526 = vmatprep.subr.bf16.mxu0 0
  %527 = vmatpush1.bf16.msra.mxu0 0
  %528 = vmatprep.subr.bf16.mxu0 0
  %529 = vmatpush1.bf16.msra.mxu0 0
  %530 = vmatprep.mubr.bf16.mxu0 0
  %531 = vmatmul.mubr.bf16.gmra.mrb[0].mxu0 %v448
  %v532 = vpop.f32.mrb[0].mxu0
  %v533 = vadd.f32 0.0, %v532
  %v534 = vpop.f32.mrb[0].mxu0
  %v535 = vpop.f32.mrb[0].mxu0
  %v536 = vadd.f32 0.0, %v535
  %v537 = vpop.f32.mrb[0].mxu0
  %538 = vdwg.mxu0
  %v539 = vadd.f32 %v437, %v533
  %v540 = vadd.f32 %v440, %v536
  %v541 = vld [vmem:[#allocation2 + $0x8] sm:$0xf0]
  %v542 = vld [vmem:[#allocation2 + $0x10] sm:$0xf]
  %v543 = vld [vmem:[#allocation2 + $0x8] sm:$0xe0]
  %v544 = vld [vmem:[#allocation2 + $0x10] sm:$0x1f]
  %545 = vmatprep.subr.bf16.mxu0 0
  %546 = vmatpush1.bf16.msra.mxu0 %v297
  %547 = vmatprep.subr.bf16.mxu0 0
  %548 = vmatpush1.bf16.msra.mxu0 %v298
  %549 = vmatprep.subr.bf16.mxu0 0
  %550 = vmatpush1.bf16.msra.mxu0 %v299
  %551 = vmatprep.subr.bf16.mxu0 0
  %552 = vmatpush1.bf16.msra.mxu0 %v300
  %553 = vmatprep.subr.bf16.mxu0 0
  %554 = vmatpush1.bf16.msra.mxu0 %v301
  %555 = vmatprep.subr.bf16.mxu0 0
  %556 = vmatpush1.bf16.msra.mxu0 %v302
  %557 = vmatprep.subr.bf16.mxu0 0
  %558 = vmatpush1.bf16.msra.mxu0 %v303
  %559 = vmatprep.subr.bf16.mxu0 0
  %560 = vmatpush1.bf16.msra.mxu0 %v304
  %561 = vmatprep.subr.bf16.mxu0 0
  %562 = vmatpush1.bf16.msra.mxu0 0
  %563 = vmatprep.subr.bf16.mxu0 0
  %564 = vmatpush1.bf16.msra.mxu0 0
  %565 = vmatprep.subr.bf16.mxu0 0
  %566 = vmatpush1.bf16.msra.mxu0 0
  %567 = vmatprep.subr.bf16.mxu0 0
  %568 = vmatpush1.bf16.msra.mxu0 0
  %569 = vmatprep.subr.bf16.mxu0 0
  %570 = vmatpush1.bf16.msra.mxu0 0
  %571 = vmatprep.subr.bf16.mxu0 0
  %572 = vmatpush1.bf16.msra.mxu0 0
  %573 = vmatprep.subr.bf16.mxu0 0
  %574 = vmatpush1.bf16.msra.mxu0 0
  %575 = vmatprep.subr.bf16.mxu0 0
  %576 = vmatpush1.bf16.msra.mxu0 0
  %577 = vmatprep.mubr.bf16.mxu0 0
  %578 = vmatmul.mubr.bf16.gmra.mrb[0].mxu0 %v57
  %v579 = vpop.f32.mrb[0].mxu0
  %v580 = vadd.f32 0.0, %v579
  %v581 = vpop.f32.mrb[0].mxu0
  %v582 = vpop.f32.mrb[0].mxu0
  %v583 = vadd.f32 0.0, %v582
  %v584 = vpop.f32.mrb[0].mxu0
  %585 = vdwg.mxu0
  %vm588 = vcmask 1043456
  %v589 = vrot.slane %v541, 4
  %v590 = vrot.slane %v542, 4
  %v591 = vsel %vm588, %v589, %v590
  %593 = vmatprep.subr.bf16.mxu0 0
  %594 = vmatpush1.bf16.msra.mxu0 %v386
  %595 = vmatprep.subr.bf16.mxu0 0
  %596 = vmatpush1.bf16.msra.mxu0 %v387
  %597 = vmatprep.subr.bf16.mxu0 0
  %598 = vmatpush1.bf16.msra.mxu0 %v388
  %599 = vmatprep.subr.bf16.mxu0 0
  %600 = vmatpush1.bf16.msra.mxu0 %v389
  %601 = vmatprep.subr.bf16.mxu0 0
  %602 = vmatpush1.bf16.msra.mxu0 %v390
  %603 = vmatprep.subr.bf16.mxu0 0
  %604 = vmatpush1.bf16.msra.mxu0 %v391
  %605 = vmatprep.subr.bf16.mxu0 0
  %606 = vmatpush1.bf16.msra.mxu0 %v392
  %607 = vmatprep.subr.bf16.mxu0 0
  %608 = vmatpush1.bf16.msra.mxu0 %v393
  %609 = vmatprep.subr.bf16.mxu0 0
  %610 = vmatpush1.bf16.msra.mxu0 0
  %611 = vmatprep.subr.bf16.mxu0 0
  %612 = vmatpush1.bf16.msra.mxu0 0
  %613 = vmatprep.subr.bf16.mxu0 0
  %614 = vmatpush1.bf16.msra.mxu0 0
  %615 = vmatprep.subr.bf16.mxu0 0
  %616 = vmatpush1.bf16.msra.mxu0 0
  %617 = vmatprep.subr.bf16.mxu0 0
  %618 = vmatpush1.bf16.msra.mxu0 0
  %619 = vmatprep.subr.bf16.mxu0 0
  %620 = vmatpush1.bf16.msra.mxu0 0
  %621 = vmatprep.subr.bf16.mxu0 0
  %622 = vmatpush1.bf16.msra.mxu0 0
  %623 = vmatprep.subr.bf16.mxu0 0
  %624 = vmatpush1.bf16.msra.mxu0 0
  %625 = vmatprep.mubr.bf16.mxu0 0
  %626 = vmatmul.mubr.bf16.gmra.mrb[0].mxu0 %v591
  %v627 = vpop.f32.mrb[0].mxu0
  %v628 = vadd.f32 %v580, %v627
  %v629 = vpop.f32.mrb[0].mxu0
  %v630 = vpop.f32.mrb[0].mxu0
  %v631 = vadd.f32 %v583, %v630
  %v632 = vpop.f32.mrb[0].mxu0
  %633 = vdwg.mxu0
  %vm636 = vcmask 1042432
  %v637 = vrot.slane %v543, 5
  %v638 = vrot.slane %v544, 5
  %v639 = vsel %vm636, %v637, %v638
  %641 = vmatprep.subr.bf16.mxu0 0
  %642 = vmatpush1.bf16.msra.mxu0 %v482
  %643 = vmatprep.subr.bf16.mxu0 0
  %644 = vmatpush1.bf16.msra.mxu0 %v483
  %645 = vmatprep.subr.bf16.mxu0 0
  %646 = vmatpush1.bf16.msra.mxu0 %v484
  %647 = vmatprep.subr.bf16.mxu0 0
  %648 = vmatpush1.bf16.msra.mxu0 %v485
  %649 = vmatprep.subr.bf16.mxu0 0
  %650 = vmatpush1.bf16.msra.mxu0 %v486
  %651 = vmatprep.subr.bf16.mxu0 0
  %652 = vmatpush1.bf16.msra.mxu0 %v487
  %653 = vmatprep.subr.bf16.mxu0 0
  %654 = vmatpush1.bf16.msra.mxu0 %v488
  %655 = vmatprep.subr.bf16.mxu0 0
  %656 = vmatpush1.bf16.msra.mxu0 %v489
  %657 = vmatprep.subr.bf16.mxu0 0
  %658 = vmatpush1.bf16.msra.mxu0 0
  %659 = vmatprep.subr.bf16.mxu0 0
  %660 = vmatpush1.bf16.msra.mxu0 0
  %661 = vmatprep.subr.bf16.mxu0 0
  %662 = vmatpush1.bf16.msra.mxu0 0
  %663 = vmatprep.subr.bf16.mxu0 0
  %664 = vmatpush1.bf16.msra.mxu0 0
  %665 = vmatprep.subr.bf16.mxu0 0
  %666 = vmatpush1.bf16.msra.mxu0 0
  %667 = vmatprep.subr.bf16.mxu0 0
  %668 = vmatpush1.bf16.msra.mxu0 0
  %669 = vmatprep.subr.bf16.mxu0 0
  %670 = vmatpush1.bf16.msra.mxu0 0
  %671 = vmatprep.subr.bf16.mxu0 0
  %672 = vmatpush1.bf16.msra.mxu0 0
  %673 = vmatprep.mubr.bf16.mxu0 0
  %674 = vmatmul.mubr.bf16.gmra.mrb[0].mxu0 %v639
  %v675 = vpop.f32.mrb[0].mxu0
  %v676 = vadd.f32 0.0, %v675
  %v677 = vpop.f32.mrb[0].mxu0
  %v678 = vpop.f32.mrb[0].mxu0
  %v679 = vadd.f32 0.0, %v678
  %v680 = vpop.f32.mrb[0].mxu0
  %681 = vdwg.mxu0
  %v682 = vadd.f32 %v628, %v676
  %v683 = vadd.f32 %v631, %v679
  %v684 = vlaneseq
  %v685 = vshrl.u32 %v684, 7
  %v686 = vsub.s32 1, %v685
  %v687 = vrot.slane %v58, %v686
  %v688 = vadd.f32 %v539, %v687
  %v689 = vadd.f32 %v540, %v687
  %v690 = vadd.f32 %v682, %v687
  %v691 = vadd.f32 %v683, %v687
  %v692 = vmax.f32 %v688, 0.0
  %v693 = vmax.f32 %v689, 0.0
  %v694 = vmax.f32 %v690, 0.0
  %v695 = vmax.f32 %v691, 0.0
  %v696 = vpack.c.bf16 %v693, %v692
  %v697 = vpack.c.bf16 %v695, %v694
  %v698 = vld [vmem:[%s2] sm:$0xf]
  %v699 = vld [vmem:[%s2 + $0x4] sm:$0xf]
  %v700 = vld [vmem:[%s2 + $0x8] sm:$0xf]
  %v701 = vld [vmem:[%s2 + $0xc] sm:$0xf]
  %v702 = vld [vmem:[%s2 + $0x10] sm:$0xf]
  %v703 = vld [vmem:[%s2 + $0x14] sm:$0xf]
  %v704 = vld [vmem:[%s2 + $0x18] sm:$0xf]
  %v705 = vld [vmem:[%s2 + $0x1c] sm:$0xf]
  %v706 = vld [vmem:[%s2 + $0x20] sm:$0xf]
  %v707 = vld [vmem:[%s2 + $0x24] sm:$0xf]
  %v708 = vld [vmem:[%s2 + $0x28] sm:$0xf]
  %v709 = vld [vmem:[%s2 + $0x2c] sm:$0xf]
  %v710 = vld [vmem:[%s2 + $0x30] sm:$0xf]
  %v711 = vld [vmem:[%s2 + $0x34] sm:$0xf]
  %v712 = vld [vmem:[%s2 + $0x38] sm:$0xf]
  %v713 = vld [vmem:[%s2 + $0x3c] sm:$0xf]
  %s714 = scalar_lea.vmem %s2, 64
  %v715 = vld [vmem:[%s714] sm:$0xf]
  %v716 = vld [vmem:[%s714 + $0x4] sm:$0xf]
  %v717 = vld [vmem:[%s714 + $0x8] sm:$0xf]
  %v718 = vld [vmem:[%s714 + $0xc] sm:$0xf]
  %v719 = vld [vmem:[%s714 + $0x10] sm:$0xf]
  %v720 = vld [vmem:[%s714 + $0x14] sm:$0xf]
  %v721 = vld [vmem:[%s714 + $0x18] sm:$0xf]
  %v722 = vld [vmem:[%s714 + $0x1c] sm:$0xf]
  %v723 = vld [vmem:[%s714 + $0x20] sm:$0xf]
  %v724 = vld [vmem:[%s714 + $0x24] sm:$0xf]
  %v725 = vld [vmem:[%s714 + $0x28] sm:$0xf]
  %v726 = vld [vmem:[%s714 + $0x2c] sm:$0xf]
  %v727 = vld [vmem:[%s714 + $0x30] sm:$0xf]
  %v728 = vld [vmem:[%s714 + $0x34] sm:$0xf]
  %v729 = vld [vmem:[%s714 + $0x38] sm:$0xf]
  %v730 = vld [vmem:[%s714 + $0x3c] sm:$0xf]
  %s731 = scalar_lea.vmem %s2, 128
  %v732 = vld [vmem:[%s731] sm:$0xf]
  %v733 = vld [vmem:[%s731 + $0x4] sm:$0xf]
  %v734 = vld [vmem:[%s731 + $0x8] sm:$0xf]
  %v735 = vld [vmem:[%s731 + $0xc] sm:$0xf]
  %v736 = vld [vmem:[%s731 + $0x10] sm:$0xf]
  %v737 = vld [vmem:[%s731 + $0x14] sm:$0xf]
  %v738 = vld [vmem:[%s731 + $0x18] sm:$0xf]
  %v739 = vld [vmem:[%s731 + $0x1c] sm:$0xf]
  %v740 = vld [vmem:[%s731 + $0x20] sm:$0xf]
  %v741 = vld [vmem:[%s731 + $0x24] sm:$0xf]
  %v742 = vld [vmem:[%s731 + $0x28] sm:$0xf]
  %v743 = vld [vmem:[%s731 + $0x2c] sm:$0xf]
  %v744 = vld [vmem:[%s731 + $0x30] sm:$0xf]
  %v745 = vld [vmem:[%s731 + $0x34] sm:$0xf]
  %v746 = vld [vmem:[%s731 + $0x38] sm:$0xf]
  %v747 = vld [vmem:[%s731 + $0x3c] sm:$0xf]
  %v749 = vshrl.u32 %v696, 16
  %v751 = vrot.slane %v749, 7
  %v752 = vshll.u32 %v696, 16
  %v754 = vor.u32 %v751, %v752
  %v757 = vld [vmem:[#allocation2] sm:$0xff]
  %v758 = vsel %vm236, %v754, %v757
  %759 = vst [vmem:[#allocation2] sm:$0xff] %v758
  %v760 = vld [vmem:[#allocation2 + $0x8] sm:$0x1]
  %v761 = vsel %vm32, %v751, %v760
  %762 = vst [vmem:[#allocation2 + $0x8] sm:$0x1] %v761
  %v764 = vshrl.u32 %v697, 16
  %v766 = vrot.slane %v764, 3
  %v767 = vshll.u32 %v697, 16
  %v769 = vrot.slane %v767, 4
  %v770 = vor.u32 %v766, %v769
  %v772 = vld [vmem:[#allocation2 + $0x8] sm:$0xf0]
  %v773 = vsel %vm253, %v770, %v772
  %774 = vst [vmem:[#allocation2 + $0x8] sm:$0xf0] %v773
  %v775 = vld [vmem:[#allocation2 + $0x10] sm:$0x1f]
  %v776 = vsel %vm258, %v770, %v775
  %777 = vst [vmem:[#allocation2 + $0x10] sm:$0x1f] %v776
  %v778 = vld [vmem:[#allocation2] sm:$0xff]
  %v779 = vld [vmem:[#allocation2] sm:$0xfe]
  %v780 = vld [vmem:[#allocation2 + $0x8] sm:$0x1]
  %v797 = vunpack.c.l.b16 %v715
  %v798 = vunpack.c.l.b16 %v716
  %v799 = vunpack.c.l.b16 %v717
  %v800 = vunpack.c.l.b16 %v718
  %v801 = vunpack.c.l.b16 %v719
  %v802 = vunpack.c.l.b16 %v720
  %v803 = vunpack.c.l.b16 %v721
  %v804 = vunpack.c.l.b16 %v722
  %v805 = vunpack.c.l.b16 %v723
  %v806 = vunpack.c.l.b16 %v724
  %v807 = vunpack.c.l.b16 %v725
  %v808 = vunpack.c.l.b16 %v726
  %v809 = vunpack.c.l.b16 %v727
  %v810 = vunpack.c.l.b16 %v728
  %v811 = vunpack.c.l.b16 %v729
  %v812 = vunpack.c.l.b16 %v730
  %v813 = vpack.c.b16 %v798, %v797
  %v814 = vpack.c.b16 %v800, %v799
  %v815 = vpack.c.b16 %v802, %v801
  %v816 = vpack.c.b16 %v804, %v803
  %v817 = vpack.c.b16 %v806, %v805
  %v818 = vpack.c.b16 %v808, %v807
  %v819 = vpack.c.b16 %v810, %v809
  %v820 = vpack.c.b16 %v812, %v811
  %829 = vmatprep.subr.bf16.mxu0 0
  %830 = vmatpush1.bf16.msra.mxu0 %v813
  %831 = vmatprep.subr.bf16.mxu0 0
  %832 = vmatpush1.bf16.msra.mxu0 %v814
  %833 = vmatprep.subr.bf16.mxu0 0
  %834 = vmatpush1.bf16.msra.mxu0 %v815
  %835 = vmatprep.subr.bf16.mxu0 0
  %836 = vmatpush1.bf16.msra.mxu0 %v816
  %837 = vmatprep.subr.bf16.mxu0 0
  %838 = vmatpush1.bf16.msra.mxu0 %v817
  %839 = vmatprep.subr.bf16.mxu0 0
  %840 = vmatpush1.bf16.msra.mxu0 %v818
  %841 = vmatprep.subr.bf16.mxu0 0
  %842 = vmatpush1.bf16.msra.mxu0 %v819
  %843 = vmatprep.subr.bf16.mxu0 0
  %844 = vmatpush1.bf16.msra.mxu0 %v820
  %845 = vmatprep.subr.bf16.mxu0 0
  %846 = vmatpush1.bf16.msra.mxu0 0
  %847 = vmatprep.subr.bf16.mxu0 0
  %848 = vmatpush1.bf16.msra.mxu0 0
  %849 = vmatprep.subr.bf16.mxu0 0
  %850 = vmatpush1.bf16.msra.mxu0 0
  %851 = vmatprep.subr.bf16.mxu0 0
  %852 = vmatpush1.bf16.msra.mxu0 0
  %853 = vmatprep.subr.bf16.mxu0 0
  %854 = vmatpush1.bf16.msra.mxu0 0
  %855 = vmatprep.subr.bf16.mxu0 0
  %856 = vmatpush1.bf16.msra.mxu0 0
  %857 = vmatprep.subr.bf16.mxu0 0
  %858 = vmatpush1.bf16.msra.mxu0 0
  %859 = vmatprep.subr.bf16.mxu0 0
  %860 = vmatpush1.bf16.msra.mxu0 0
  %861 = vmatprep.mubr.bf16.mxu0 0
  %862 = vmatmul.mubr.bf16.gmra.mrb[0].mxu0 %v696
  %v863 = vpop.f32.mrb[0].mxu0
  %v864 = vadd.f32 0.0, %v863
  %v865 = vpop.f32.mrb[0].mxu0
  %v866 = vpop.f32.mrb[0].mxu0
  %v867 = vadd.f32 0.0, %v866
  %v868 = vpop.f32.mrb[0].mxu0
  %869 = vdwg.mxu0
  %v886 = vunpack.c.l.b16 %v698
  %v887 = vunpack.c.l.b16 %v699
  %v888 = vunpack.c.l.b16 %v700
  %v889 = vunpack.c.l.b16 %v701
  %v890 = vunpack.c.l.b16 %v702
  %v891 = vunpack.c.l.b16 %v703
  %v892 = vunpack.c.l.b16 %v704
  %v893 = vunpack.c.l.b16 %v705
  %v894 = vunpack.c.l.b16 %v706
  %v895 = vunpack.c.l.b16 %v707
  %v896 = vunpack.c.l.b16 %v708
  %v897 = vunpack.c.l.b16 %v709
  %v898 = vunpack.c.l.b16 %v710
  %v899 = vunpack.c.l.b16 %v711
  %v900 = vunpack.c.l.b16 %v712
  %v901 = vunpack.c.l.b16 %v713
  %v902 = vpack.c.b16 %v887, %v886
  %v903 = vpack.c.b16 %v889, %v888
  %v904 = vpack.c.b16 %v891, %v890
  %v905 = vpack.c.b16 %v893, %v892
  %v906 = vpack.c.b16 %v895, %v894
  %v907 = vpack.c.b16 %v897, %v896
  %v908 = vpack.c.b16 %v899, %v898
  %v909 = vpack.c.b16 %v901, %v900
  %918 = vmatprep.subr.bf16.mxu0 0
  %919 = vmatpush1.bf16.msra.mxu0 %v902
  %920 = vmatprep.subr.bf16.mxu0 0
  %921 = vmatpush1.bf16.msra.mxu0 %v903
  %922 = vmatprep.subr.bf16.mxu0 0
  %923 = vmatpush1.bf16.msra.mxu0 %v904
  %924 = vmatprep.subr.bf16.mxu0 0
  %925 = vmatpush1.bf16.msra.mxu0 %v905
  %926 = vmatprep.subr.bf16.mxu0 0
  %927 = vmatpush1.bf16.msra.mxu0 %v906
  %928 = vmatprep.subr.bf16.mxu0 0
  %929 = vmatpush1.bf16.msra.mxu0 %v907
  %930 = vmatprep.subr.bf16.mxu0 0
  %931 = vmatpush1.bf16.msra.mxu0 %v908
  %932 = vmatprep.subr.bf16.mxu0 0
  %933 = vmatpush1.bf16.msra.mxu0 %v909
  %934 = vmatprep.subr.bf16.mxu0 0
  %935 = vmatpush1.bf16.msra.mxu0 0
  %936 = vmatprep.subr.bf16.mxu0 0
  %937 = vmatpush1.bf16.msra.mxu0 0
  %938 = vmatprep.subr.bf16.mxu0 0
  %939 = vmatpush1.bf16.msra.mxu0 0
  %940 = vmatprep.subr.bf16.mxu0 0
  %941 = vmatpush1.bf16.msra.mxu0 0
  %942 = vmatprep.subr.bf16.mxu0 0
  %943 = vmatpush1.bf16.msra.mxu0 0
  %944 = vmatprep.subr.bf16.mxu0 0
  %945 = vmatpush1.bf16.msra.mxu0 0
  %946 = vmatprep.subr.bf16.mxu0 0
  %947 = vmatpush1.bf16.msra.mxu0 0
  %948 = vmatprep.subr.bf16.mxu0 0
  %949 = vmatpush1.bf16.msra.mxu0 0
  %950 = vmatprep.mubr.bf16.mxu0 0
  %951 = vmatmul.mubr.bf16.gmra.mrb[0].mxu0 %v778
  %v952 = vpop.f32.mrb[0].mxu0
  %v953 = vadd.f32 %v864, %v952
  %v954 = vpop.f32.mrb[0].mxu0
  %v955 = vpop.f32.mrb[0].mxu0
  %v956 = vadd.f32 %v867, %v955
  %v957 = vpop.f32.mrb[0].mxu0
  %958 = vdwg.mxu0
  %v961 = vrot.slane %v779, 1
  %v962 = vrot.slane %v780, 1
  %v963 = vsel %vm445, %v961, %v962
  %v981 = vunpack.c.l.b16 %v732
  %v982 = vunpack.c.l.b16 %v733
  %v983 = vunpack.c.l.b16 %v734
  %v984 = vunpack.c.l.b16 %v735
  %v985 = vunpack.c.l.b16 %v736
  %v986 = vunpack.c.l.b16 %v737
  %v987 = vunpack.c.l.b16 %v738
  %v988 = vunpack.c.l.b16 %v739
  %v989 = vunpack.c.l.b16 %v740
  %v990 = vunpack.c.l.b16 %v741
  %v991 = vunpack.c.l.b16 %v742
  %v992 = vunpack.c.l.b16 %v743
  %v993 = vunpack.c.l.b16 %v744
  %v994 = vunpack.c.l.b16 %v745
  %v995 = vunpack.c.l.b16 %v746
  %v996 = vunpack.c.l.b16 %v747
  %v997 = vpack.c.b16 %v982, %v981
  %v998 = vpack.c.b16 %v984, %v983
  %v999 = vpack.c.b16 %v986, %v985
  %v1000 = vpack.c.b16 %v988, %v987
  %v1001 = vpack.c.b16 %v990, %v989
  %v1002 = vpack.c.b16 %v992, %v991
  %v1003 = vpack.c.b16 %v994, %v993
  %v1004 = vpack.c.b16 %v996, %v995
  %1013 = vmatprep.subr.bf16.mxu0 0
  %1014 = vmatpush1.bf16.msra.mxu0 %v997
  %1015 = vmatprep.subr.bf16.mxu0 0
  %1016 = vmatpush1.bf16.msra.mxu0 %v998
  %1017 = vmatprep.subr.bf16.mxu0 0
  %1018 = vmatpush1.bf16.msra.mxu0 %v999
  %1019 = vmatprep.subr.bf16.mxu0 0
  %1020 = vmatpush1.bf16.msra.mxu0 %v1000
  %1021 = vmatprep.subr.bf16.mxu0 0
  %1022 = vmatpush1.bf16.msra.mxu0 %v1001
  %1023 = vmatprep.subr.bf16.mxu0 0
  %1024 = vmatpush1.bf16.msra.mxu0 %v1002
  %1025 = vmatprep.subr.bf16.mxu0 0
  %1026 = vmatpush1.bf16.msra.mxu0 %v1003
  %1027 = vmatprep.subr.bf16.mxu0 0
  %1028 = vmatpush1.bf16.msra.mxu0 %v1004
  %1029 = vmatprep.subr.bf16.mxu0 0
  %1030 = vmatpush1.bf16.msra.mxu0 0
  %1031 = vmatprep.subr.bf16.mxu0 0
  %1032 = vmatpush1.bf16.msra.mxu0 0
  %1033 = vmatprep.subr.bf16.mxu0 0
  %1034 = vmatpush1.bf16.msra.mxu0 0
  %1035 = vmatprep.subr.bf16.mxu0 0
  %1036 = vmatpush1.bf16.msra.mxu0 0
  %1037 = vmatprep.subr.bf16.mxu0 0
  %1038 = vmatpush1.bf16.msra.mxu0 0
  %1039 = vmatprep.subr.bf16.mxu0 0
  %1040 = vmatpush1.bf16.msra.mxu0 0
  %1041 = vmatprep.subr.bf16.mxu0 0
  %1042 = vmatpush1.bf16.msra.mxu0 0
  %1043 = vmatprep.subr.bf16.mxu0 0
  %1044 = vmatpush1.bf16.msra.mxu0 0
  %1045 = vmatprep.mubr.bf16.mxu0 0
  %1046 = vmatmul.mubr.bf16.gmra.mrb[0].mxu0 %v963
  %v1047 = vpop.f32.mrb[0].mxu0
  %v1048 = vadd.f32 0.0, %v1047
  %v1049 = vpop.f32.mrb[0].mxu0
  %v1050 = vpop.f32.mrb[0].mxu0
  %v1051 = vadd.f32 0.0, %v1050
  %v1052 = vpop.f32.mrb[0].mxu0
  %1053 = vdwg.mxu0
  %v1054 = vadd.f32 %v953, %v1048
  %v1055 = vadd.f32 %v956, %v1051
  %v1056 = vld [vmem:[#allocation2 + $0x8] sm:$0xf0]
  %v1057 = vld [vmem:[#allocation2 + $0x10] sm:$0xf]
  %v1058 = vld [vmem:[#allocation2 + $0x8] sm:$0xe0]
  %v1059 = vld [vmem:[#allocation2 + $0x10] sm:$0x1f]
  %1060 = vmatprep.subr.bf16.mxu0 0
  %1061 = vmatpush1.bf16.msra.mxu0 %v813
  %1062 = vmatprep.subr.bf16.mxu0 0
  %1063 = vmatpush1.bf16.msra.mxu0 %v814
  %1064 = vmatprep.subr.bf16.mxu0 0
  %1065 = vmatpush1.bf16.msra.mxu0 %v815
  %1066 = vmatprep.subr.bf16.mxu0 0
  %1067 = vmatpush1.bf16.msra.mxu0 %v816
  %1068 = vmatprep.subr.bf16.mxu0 0
  %1069 = vmatpush1.bf16.msra.mxu0 %v817
  %1070 = vmatprep.subr.bf16.mxu0 0
  %1071 = vmatpush1.bf16.msra.mxu0 %v818
  %1072 = vmatprep.subr.bf16.mxu0 0
  %1073 = vmatpush1.bf16.msra.mxu0 %v819
  %1074 = vmatprep.subr.bf16.mxu0 0
  %1075 = vmatpush1.bf16.msra.mxu0 %v820
  %1076 = vmatprep.subr.bf16.mxu0 0
  %1077 = vmatpush1.bf16.msra.mxu0 0
  %1078 = vmatprep.subr.bf16.mxu0 0
  %1079 = vmatpush1.bf16.msra.mxu0 0
  %1080 = vmatprep.subr.bf16.mxu0 0
  %1081 = vmatpush1.bf16.msra.mxu0 0
  %1082 = vmatprep.subr.bf16.mxu0 0
  %1083 = vmatpush1.bf16.msra.mxu0 0
  %1084 = vmatprep.subr.bf16.mxu0 0
  %1085 = vmatpush1.bf16.msra.mxu0 0
  %1086 = vmatprep.subr.bf16.mxu0 0
  %1087 = vmatpush1.bf16.msra.mxu0 0
  %1088 = vmatprep.subr.bf16.mxu0 0
  %1089 = vmatpush1.bf16.msra.mxu0 0
  %1090 = vmatprep.subr.bf16.mxu0 0
  %1091 = vmatpush1.bf16.msra.mxu0 0
  %1092 = vmatprep.mubr.bf16.mxu0 0
  %1093 = vmatmul.mubr.bf16.gmra.mrb[0].mxu0 %v697
  %v1094 = vpop.f32.mrb[0].mxu0
  %v1095 = vadd.f32 0.0, %v1094
  %v1096 = vpop.f32.mrb[0].mxu0
  %v1097 = vpop.f32.mrb[0].mxu0
  %v1098 = vadd.f32 0.0, %v1097
  %v1099 = vpop.f32.mrb[0].mxu0
  %1100 = vdwg.mxu0
  %v1103 = vrot.slane %v1056, 4
  %v1104 = vrot.slane %v1057, 4
  %v1105 = vsel %vm588, %v1103, %v1104
  %1107 = vmatprep.subr.bf16.mxu0 0
  %1108 = vmatpush1.bf16.msra.mxu0 %v902
  %1109 = vmatprep.subr.bf16.mxu0 0
  %1110 = vmatpush1.bf16.msra.mxu0 %v903
  %1111 = vmatprep.subr.bf16.mxu0 0
  %1112 = vmatpush1.bf16.msra.mxu0 %v904
  %1113 = vmatprep.subr.bf16.mxu0 0
  %1114 = vmatpush1.bf16.msra.mxu0 %v905
  %1115 = vmatprep.subr.bf16.mxu0 0
  %1116 = vmatpush1.bf16.msra.mxu0 %v906
  %1117 = vmatprep.subr.bf16.mxu0 0
  %1118 = vmatpush1.bf16.msra.mxu0 %v907
  %1119 = vmatprep.subr.bf16.mxu0 0
  %1120 = vmatpush1.bf16.msra.mxu0 %v908
  %1121 = vmatprep.subr.bf16.mxu0 0
  %1122 = vmatpush1.bf16.msra.mxu0 %v909
  %1123 = vmatprep.subr.bf16.mxu0 0
  %1124 = vmatpush1.bf16.msra.mxu0 0
  %1125 = vmatprep.subr.bf16.mxu0 0
  %1126 = vmatpush1.bf16.msra.mxu0 0
  %1127 = vmatprep.subr.bf16.mxu0 0
  %1128 = vmatpush1.bf16.msra.mxu0 0
  %1129 = vmatprep.subr.bf16.mxu0 0
  %1130 = vmatpush1.bf16.msra.mxu0 0
  %1131 = vmatprep.subr.bf16.mxu0 0
  %1132 = vmatpush1.bf16.msra.mxu0 0
  %1133 = vmatprep.subr.bf16.mxu0 0
  %1134 = vmatpush1.bf16.msra.mxu0 0
  %1135 = vmatprep.subr.bf16.mxu0 0
  %1136 = vmatpush1.bf16.msra.mxu0 0
  %1137 = vmatprep.subr.bf16.mxu0 0
  %1138 = vmatpush1.bf16.msra.mxu0 0
  %1139 = vmatprep.mubr.bf16.mxu0 0
  %1140 = vmatmul.mubr.bf16.gmra.mrb[0].mxu0 %v1105
  %v1141 = vpop.f32.mrb[0].mxu0
  %v1142 = vadd.f32 %v1095, %v1141
  %v1143 = vpop.f32.mrb[0].mxu0
  %v1144 = vpop.f32.mrb[0].mxu0
  %v1145 = vadd.f32 %v1098, %v1144
  %v1146 = vpop.f32.mrb[0].mxu0
  %1147 = vdwg.mxu0
  %v1150 = vrot.slane %v1058, 5
  %v1151 = vrot.slane %v1059, 5
  %v1152 = vsel %vm636, %v1150, %v1151
  %1154 = vmatprep.subr.bf16.mxu0 0
  %1155 = vmatpush1.bf16.msra.mxu0 %v997
  %1156 = vmatprep.subr.bf16.mxu0 0
  %1157 = vmatpush1.bf16.msra.mxu0 %v998
  %1158 = vmatprep.subr.bf16.mxu0 0
  %1159 = vmatpush1.bf16.msra.mxu0 %v999
  %1160 = vmatprep.subr.bf16.mxu0 0
  %1161 = vmatpush1.bf16.msra.mxu0 %v1000
  %1162 = vmatprep.subr.bf16.mxu0 0
  %1163 = vmatpush1.bf16.msra.mxu0 %v1001
  %1164 = vmatprep.subr.bf16.mxu0 0
  %1165 = vmatpush1.bf16.msra.mxu0 %v1002
  %1166 = vmatprep.subr.bf16.mxu0 0
  %1167 = vmatpush1.bf16.msra.mxu0 %v1003
  %1168 = vmatprep.subr.bf16.mxu0 0
  %1169 = vmatpush1.bf16.msra.mxu0 %v1004
  %1170 = vmatprep.subr.bf16.mxu0 0
  %1171 = vmatpush1.bf16.msra.mxu0 0
  %1172 = vmatprep.subr.bf16.mxu0 0
  %1173 = vmatpush1.bf16.msra.mxu0 0
  %1174 = vmatprep.subr.bf16.mxu0 0
  %1175 = vmatpush1.bf16.msra.mxu0 0
  %1176 = vmatprep.subr.bf16.mxu0 0
  %1177 = vmatpush1.bf16.msra.mxu0 0
  %1178 = vmatprep.subr.bf16.mxu0 0
  %1179 = vmatpush1.bf16.msra.mxu0 0
  %1180 = vmatprep.subr.bf16.mxu0 0
  %1181 = vmatpush1.bf16.msra.mxu0 0
  %1182 = vmatprep.subr.bf16.mxu0 0
  %1183 = vmatpush1.bf16.msra.mxu0 0
  %1184 = vmatprep.subr.bf16.mxu0 0
  %1185 = vmatpush1.bf16.msra.mxu0 0
  %1186 = vmatprep.mubr.bf16.mxu0 0
  %1187 = vmatmul.mubr.bf16.gmra.mrb[0].mxu0 %v1152
  %v1188 = vpop.f32.mrb[0].mxu0
  %v1189 = vadd.f32 0.0, %v1188
  %v1190 = vpop.f32.mrb[0].mxu0
  %v1191 = vpop.f32.mrb[0].mxu0
  %v1192 = vadd.f32 0.0, %v1191
  %v1193 = vpop.f32.mrb[0].mxu0
  %1194 = vdwg.mxu0
  %v1195 = vadd.f32 %v1142, %v1189
  %v1196 = vadd.f32 %v1145, %v1192
  %v1197 = vlaneseq
  %v1198 = vshrl.u32 %v1197, 7
  %v1199 = vsub.s32 2, %v1198
  %v1200 = vrot.slane %v58, %v1199
  %v1201 = vadd.f32 %v1054, %v1200
  %v1202 = vadd.f32 %v1055, %v1200
  %v1203 = vadd.f32 %v1195, %v1200
  %v1204 = vadd.f32 %v1196, %v1200
  %v1205 = vadd.f32 %v1201, %v162
  %v1206 = vadd.f32 %v1202, %v165
  %v1207 = vadd.f32 %v1203, %v170
  %v1208 = vadd.f32 %v1204, %v173
  %v1209 = vmax.f32 %v1205, 0.0
  %v1210 = vmax.f32 %v1206, 0.0
  %v1211 = vmax.f32 %v1207, 0.0
  %v1212 = vmax.f32 %v1208, 0.0
  %v1213 = vpack.c.bf16 %v1210, %v1209
  %v1214 = vpack.c.bf16 %v1212, %v1211
  %v1215 = vld [vmem:[%s3] sm:$0xf]
  %v1216 = vld [vmem:[%s3 + $0x4] sm:$0xf]
  %v1217 = vld [vmem:[%s3 + $0x8] sm:$0xf]
  %v1218 = vld [vmem:[%s3 + $0xc] sm:$0xf]
  %v1219 = vld [vmem:[%s3 + $0x10] sm:$0xf]
  %v1220 = vld [vmem:[%s3 + $0x14] sm:$0xf]
  %v1221 = vld [vmem:[%s3 + $0x18] sm:$0xf]
  %v1222 = vld [vmem:[%s3 + $0x1c] sm:$0xf]
  %v1223 = vld [vmem:[%s3 + $0x20] sm:$0xf]
  %v1224 = vld [vmem:[%s3 + $0x24] sm:$0xf]
  %v1225 = vld [vmem:[%s3 + $0x28] sm:$0xf]
  %v1226 = vld [vmem:[%s3 + $0x2c] sm:$0xf]
  %v1227 = vld [vmem:[%s3 + $0x30] sm:$0xf]
  %v1228 = vld [vmem:[%s3 + $0x34] sm:$0xf]
  %v1229 = vld [vmem:[%s3 + $0x38] sm:$0xf]
  %v1230 = vld [vmem:[%s3 + $0x3c] sm:$0xf]
  %s1231 = scalar_lea.vmem %s3, 64
  %v1232 = vld [vmem:[%s1231] sm:$0xf]
  %v1233 = vld [vmem:[%s1231 + $0x4] sm:$0xf]
  %v1234 = vld [vmem:[%s1231 + $0x8] sm:$0xf]
  %v1235 = vld [vmem:[%s1231 + $0xc] sm:$0xf]
  %v1236 = vld [vmem:[%s1231 + $0x10] sm:$0xf]
  %v1237 = vld [vmem:[%s1231 + $0x14] sm:$0xf]
  %v1238 = vld [vmem:[%s1231 + $0x18] sm:$0xf]
  %v1239 = vld [vmem:[%s1231 + $0x1c] sm:$0xf]
  %v1240 = vld [vmem:[%s1231 + $0x20] sm:$0xf]
  %v1241 = vld [vmem:[%s1231 + $0x24] sm:$0xf]
  %v1242 = vld [vmem:[%s1231 + $0x28] sm:$0xf]
  %v1243 = vld [vmem:[%s1231 + $0x2c] sm:$0xf]
  %v1244 = vld [vmem:[%s1231 + $0x30] sm:$0xf]
  %v1245 = vld [vmem:[%s1231 + $0x34] sm:$0xf]
  %v1246 = vld [vmem:[%s1231 + $0x38] sm:$0xf]
  %v1247 = vld [vmem:[%s1231 + $0x3c] sm:$0xf]
  %s1248 = scalar_lea.vmem %s3, 128
  %v1249 = vld [vmem:[%s1248] sm:$0xf]
  %v1250 = vld [vmem:[%s1248 + $0x4] sm:$0xf]
  %v1251 = vld [vmem:[%s1248 + $0x8] sm:$0xf]
  %v1252 = vld [vmem:[%s1248 + $0xc] sm:$0xf]
  %v1253 = vld [vmem:[%s1248 + $0x10] sm:$0xf]
  %v1254 = vld [vmem:[%s1248 + $0x14] sm:$0xf]
  %v1255 = vld [vmem:[%s1248 + $0x18] sm:$0xf]
  %v1256 = vld [vmem:[%s1248 + $0x1c] sm:$0xf]
  %v1257 = vld [vmem:[%s1248 + $0x20] sm:$0xf]
  %v1258 = vld [vmem:[%s1248 + $0x24] sm:$0xf]
  %v1259 = vld [vmem:[%s1248 + $0x28] sm:$0xf]
  %v1260 = vld [vmem:[%s1248 + $0x2c] sm:$0xf]
  %v1261 = vld [vmem:[%s1248 + $0x30] sm:$0xf]
  %v1262 = vld [vmem:[%s1248 + $0x34] sm:$0xf]
  %v1263 = vld [vmem:[%s1248 + $0x38] sm:$0xf]
  %v1264 = vld [vmem:[%s1248 + $0x3c] sm:$0xf]
  %v1266 = vshrl.u32 %v1213, 16
  %v1268 = vrot.slane %v1266, 7
  %v1269 = vshll.u32 %v1213, 16
  %v1271 = vor.u32 %v1268, %v1269
  %v1274 = vld [vmem:[#allocation2] sm:$0xff]
  %v1275 = vsel %vm236, %v1271, %v1274
  %1276 = vst [vmem:[#allocation2] sm:$0xff] %v1275
  %v1277 = vld [vmem:[#allocation2 + $0x8] sm:$0x1]
  %v1278 = vsel %vm32, %v1268, %v1277
  %1279 = vst [vmem:[#allocation2 + $0x8] sm:$0x1] %v1278
  %v1281 = vshrl.u32 %v1214, 16
  %v1283 = vrot.slane %v1281, 3
  %v1284 = vshll.u32 %v1214, 16
  %v1286 = vrot.slane %v1284, 4
  %v1287 = vor.u32 %v1283, %v1286
  %v1289 = vld [vmem:[#allocation2 + $0x8] sm:$0xf0]
  %v1290 = vsel %vm253, %v1287, %v1289
  %1291 = vst [vmem:[#allocation2 + $0x8] sm:$0xf0] %v1290
  %v1292 = vld [vmem:[#allocation2 + $0x10] sm:$0x1f]
  %v1293 = vsel %vm258, %v1287, %v1292
  %1294 = vst [vmem:[#allocation2 + $0x10] sm:$0x1f] %v1293
  %v1295 = vld [vmem:[#allocation2] sm:$0xff]
  %v1296 = vld [vmem:[#allocation2] sm:$0xfe]
  %v1297 = vld [vmem:[#allocation2 + $0x8] sm:$0x1]
  %v1314 = vunpack.c.l.b16 %v1232
  %v1315 = vunpack.c.l.b16 %v1233
  %v1316 = vunpack.c.l.b16 %v1234
  %v1317 = vunpack.c.l.b16 %v1235
  %v1318 = vunpack.c.l.b16 %v1236
  %v1319 = vunpack.c.l.b16 %v1237
  %v1320 = vunpack.c.l.b16 %v1238
  %v1321 = vunpack.c.l.b16 %v1239
  %v1322 = vunpack.c.l.b16 %v1240
  %v1323 = vunpack.c.l.b16 %v1241
  %v1324 = vunpack.c.l.b16 %v1242
  %v1325 = vunpack.c.l.b16 %v1243
  %v1326 = vunpack.c.l.b16 %v1244
  %v1327 = vunpack.c.l.b16 %v1245
  %v1328 = vunpack.c.l.b16 %v1246
  %v1329 = vunpack.c.l.b16 %v1247
  %v1330 = vpack.c.b16 %v1315, %v1314
  %v1331 = vpack.c.b16 %v1317, %v1316
  %v1332 = vpack.c.b16 %v1319, %v1318
  %v1333 = vpack.c.b16 %v1321, %v1320
  %v1334 = vpack.c.b16 %v1323, %v1322
  %v1335 = vpack.c.b16 %v1325, %v1324
  %v1336 = vpack.c.b16 %v1327, %v1326
  %v1337 = vpack.c.b16 %v1329, %v1328
  %1346 = vmatprep.subr.bf16.mxu0 0
  %1347 = vmatpush1.bf16.msra.mxu0 %v1330
  %1348 = vmatprep.subr.bf16.mxu0 0
  %1349 = vmatpush1.bf16.msra.mxu0 %v1331
  %1350 = vmatprep.subr.bf16.mxu0 0
  %1351 = vmatpush1.bf16.msra.mxu0 %v1332
  %1352 = vmatprep.subr.bf16.mxu0 0
  %1353 = vmatpush1.bf16.msra.mxu0 %v1333
  %1354 = vmatprep.subr.bf16.mxu0 0
  %1355 = vmatpush1.bf16.msra.mxu0 %v1334
  %1356 = vmatprep.subr.bf16.mxu0 0
  %1357 = vmatpush1.bf16.msra.mxu0 %v1335
  %1358 = vmatprep.subr.bf16.mxu0 0
  %1359 = vmatpush1.bf16.msra.mxu0 %v1336
  %1360 = vmatprep.subr.bf16.mxu0 0
  %1361 = vmatpush1.bf16.msra.mxu0 %v1337
  %1362 = vmatprep.subr.bf16.mxu0 0
  %1363 = vmatpush1.bf16.msra.mxu0 0
  %1364 = vmatprep.subr.bf16.mxu0 0
  %1365 = vmatpush1.bf16.msra.mxu0 0
  %1366 = vmatprep.subr.bf16.mxu0 0
  %1367 = vmatpush1.bf16.msra.mxu0 0
  %1368 = vmatprep.subr.bf16.mxu0 0
  %1369 = vmatpush1.bf16.msra.mxu0 0
  %1370 = vmatprep.subr.bf16.mxu0 0
  %1371 = vmatpush1.bf16.msra.mxu0 0
  %1372 = vmatprep.subr.bf16.mxu0 0
  %1373 = vmatpush1.bf16.msra.mxu0 0
  %1374 = vmatprep.subr.bf16.mxu0 0
  %1375 = vmatpush1.bf16.msra.mxu0 0
  %1376 = vmatprep.subr.bf16.mxu0 0
  %1377 = vmatpush1.bf16.msra.mxu0 0
  %1378 = vmatprep.mubr.bf16.mxu0 0
  %1379 = vmatmul.mubr.bf16.gmra.mrb[0].mxu0 %v1213
  %v1380 = vpop.f32.mrb[0].mxu0
  %v1381 = vadd.f32 0.0, %v1380
  %v1382 = vpop.f32.mrb[0].mxu0
  %v1383 = vpop.f32.mrb[0].mxu0
  %v1384 = vadd.f32 0.0, %v1383
  %v1385 = vpop.f32.mrb[0].mxu0
  %1386 = vdwg.mxu0
  %v1403 = vunpack.c.l.b16 %v1215
  %v1404 = vunpack.c.l.b16 %v1216
  %v1405 = vunpack.c.l.b16 %v1217
  %v1406 = vunpack.c.l.b16 %v1218
  %v1407 = vunpack.c.l.b16 %v1219
  %v1408 = vunpack.c.l.b16 %v1220
  %v1409 = vunpack.c.l.b16 %v1221
  %v1410 = vunpack.c.l.b16 %v1222
  %v1411 = vunpack.c.l.b16 %v1223
  %v1412 = vunpack.c.l.b16 %v1224
  %v1413 = vunpack.c.l.b16 %v1225
  %v1414 = vunpack.c.l.b16 %v1226
  %v1415 = vunpack.c.l.b16 %v1227
  %v1416 = vunpack.c.l.b16 %v1228
  %v1417 = vunpack.c.l.b16 %v1229
  %v1418 = vunpack.c.l.b16 %v1230
  %v1419 = vpack.c.b16 %v1404, %v1403
  %v1420 = vpack.c.b16 %v1406, %v1405
  %v1421 = vpack.c.b16 %v1408, %v1407
  %v1422 = vpack.c.b16 %v1410, %v1409
  %v1423 = vpack.c.b16 %v1412, %v1411
  %v1424 = vpack.c.b16 %v1414, %v1413
  %v1425 = vpack.c.b16 %v1416, %v1415
  %v1426 = vpack.c.b16 %v1418, %v1417
  %1435 = vmatprep.subr.bf16.mxu0 0
  %1436 = vmatpush1.bf16.msra.mxu0 %v1419
  %1437 = vmatprep.subr.bf16.mxu0 0
  %1438 = vmatpush1.bf16.msra.mxu0 %v1420
  %1439 = vmatprep.subr.bf16.mxu0 0
  %1440 = vmatpush1.bf16.msra.mxu0 %v1421
  %1441 = vmatprep.subr.bf16.mxu0 0
  %1442 = vmatpush1.bf16.msra.mxu0 %v1422
  %1443 = vmatprep.subr.bf16.mxu0 0
  %1444 = vmatpush1.bf16.msra.mxu0 %v1423
  %1445 = vmatprep.subr.bf16.mxu0 0
  %1446 = vmatpush1.bf16.msra.mxu0 %v1424
  %1447 = vmatprep.subr.bf16.mxu0 0
  %1448 = vmatpush1.bf16.msra.mxu0 %v1425
  %1449 = vmatprep.subr.bf16.mxu0 0
  %1450 = vmatpush1.bf16.msra.mxu0 %v1426
  %1451 = vmatprep.subr.bf16.mxu0 0
  %1452 = vmatpush1.bf16.msra.mxu0 0
  %1453 = vmatprep.subr.bf16.mxu0 0
  %1454 = vmatpush1.bf16.msra.mxu0 0
  %1455 = vmatprep.subr.bf16.mxu0 0
  %1456 = vmatpush1.bf16.msra.mxu0 0
  %1457 = vmatprep.subr.bf16.mxu0 0
  %1458 = vmatpush1.bf16.msra.mxu0 0
  %1459 = vmatprep.subr.bf16.mxu0 0
  %1460 = vmatpush1.bf16.msra.mxu0 0
  %1461 = vmatprep.subr.bf16.mxu0 0
  %1462 = vmatpush1.bf16.msra.mxu0 0
  %1463 = vmatprep.subr.bf16.mxu0 0
  %1464 = vmatpush1.bf16.msra.mxu0 0
  %1465 = vmatprep.subr.bf16.mxu0 0
  %1466 = vmatpush1.bf16.msra.mxu0 0
  %1467 = vmatprep.mubr.bf16.mxu0 0
  %1468 = vmatmul.mubr.bf16.gmra.mrb[0].mxu0 %v1295
  %v1469 = vpop.f32.mrb[0].mxu0
  %v1470 = vadd.f32 %v1381, %v1469
  %v1471 = vpop.f32.mrb[0].mxu0
  %v1472 = vpop.f32.mrb[0].mxu0
  %v1473 = vadd.f32 %v1384, %v1472
  %v1474 = vpop.f32.mrb[0].mxu0
  %1475 = vdwg.mxu0
  %v1478 = vrot.slane %v1296, 1
  %v1479 = vrot.slane %v1297, 1
  %v1480 = vsel %vm445, %v1478, %v1479
  %v1498 = vunpack.c.l.b16 %v1249
  %v1499 = vunpack.c.l.b16 %v1250
  %v1500 = vunpack.c.l.b16 %v1251
  %v1501 = vunpack.c.l.b16 %v1252
  %v1502 = vunpack.c.l.b16 %v1253
  %v1503 = vunpack.c.l.b16 %v1254
  %v1504 = vunpack.c.l.b16 %v1255
  %v1505 = vunpack.c.l.b16 %v1256
  %v1506 = vunpack.c.l.b16 %v1257
  %v1507 = vunpack.c.l.b16 %v1258
  %v1508 = vunpack.c.l.b16 %v1259
  %v1509 = vunpack.c.l.b16 %v1260
  %v1510 = vunpack.c.l.b16 %v1261
  %v1511 = vunpack.c.l.b16 %v1262
  %v1512 = vunpack.c.l.b16 %v1263
  %v1513 = vunpack.c.l.b16 %v1264
  %v1514 = vpack.c.b16 %v1499, %v1498
  %v1515 = vpack.c.b16 %v1501, %v1500
  %v1516 = vpack.c.b16 %v1503, %v1502
  %v1517 = vpack.c.b16 %v1505, %v1504
  %v1518 = vpack.c.b16 %v1507, %v1506
  %v1519 = vpack.c.b16 %v1509, %v1508
  %v1520 = vpack.c.b16 %v1511, %v1510
  %v1521 = vpack.c.b16 %v1513, %v1512
  %1530 = vmatprep.subr.bf16.mxu0 0
  %1531 = vmatpush1.bf16.msra.mxu0 %v1514
  %1532 = vmatprep.subr.bf16.mxu0 0
  %1533 = vmatpush1.bf16.msra.mxu0 %v1515
  %1534 = vmatprep.subr.bf16.mxu0 0
  %1535 = vmatpush1.bf16.msra.mxu0 %v1516
  %1536 = vmatprep.subr.bf16.mxu0 0
  %1537 = vmatpush1.bf16.msra.mxu0 %v1517
  %1538 = vmatprep.subr.bf16.mxu0 0
  %1539 = vmatpush1.bf16.msra.mxu0 %v1518
  %1540 = vmatprep.subr.bf16.mxu0 0
  %1541 = vmatpush1.bf16.msra.mxu0 %v1519
  %1542 = vmatprep.subr.bf16.mxu0 0
  %1543 = vmatpush1.bf16.msra.mxu0 %v1520
  %1544 = vmatprep.subr.bf16.mxu0 0
  %1545 = vmatpush1.bf16.msra.mxu0 %v1521
  %1546 = vmatprep.subr.bf16.mxu0 0
  %1547 = vmatpush1.bf16.msra.mxu0 0
  %1548 = vmatprep.subr.bf16.mxu0 0
  %1549 = vmatpush1.bf16.msra.mxu0 0
  %1550 = vmatprep.subr.bf16.mxu0 0
  %1551 = vmatpush1.bf16.msra.mxu0 0
  %1552 = vmatprep.subr.bf16.mxu0 0
  %1553 = vmatpush1.bf16.msra.mxu0 0
  %1554 = vmatprep.subr.bf16.mxu0 0
  %1555 = vmatpush1.bf16.msra.mxu0 0
  %1556 = vmatprep.subr.bf16.mxu0 0
  %1557 = vmatpush1.bf16.msra.mxu0 0
  %1558 = vmatprep.subr.bf16.mxu0 0
  %1559 = vmatpush1.bf16.msra.mxu0 0
  %1560 = vmatprep.subr.bf16.mxu0 0
  %1561 = vmatpush1.bf16.msra.mxu0 0
  %1562 = vmatprep.mubr.bf16.mxu0 0
  %1563 = vmatmul.mubr.bf16.gmra.mrb[0].mxu0 %v1480
  %v1564 = vpop.f32.mrb[0].mxu0
  %v1565 = vadd.f32 0.0, %v1564
  %v1566 = vpop.f32.mrb[0].mxu0
  %v1567 = vpop.f32.mrb[0].mxu0
  %v1568 = vadd.f32 0.0, %v1567
  %v1569 = vpop.f32.mrb[0].mxu0
  %1570 = vdwg.mxu0
  %v1571 = vadd.f32 %v1470, %v1565
  %v1572 = vadd.f32 %v1473, %v1568
  %v1573 = vld [vmem:[#allocation2 + $0x8] sm:$0xf0]
  %v1574 = vld [vmem:[#allocation2 + $0x10] sm:$0xf]
  %v1575 = vld [vmem:[#allocation2 + $0x8] sm:$0xe0]
  %v1576 = vld [vmem:[#allocation2 + $0x10] sm:$0x1f]
  %1577 = vmatprep.subr.bf16.mxu0 0
  %1578 = vmatpush1.bf16.msra.mxu0 %v1330
  %1579 = vmatprep.subr.bf16.mxu0 0
  %1580 = vmatpush1.bf16.msra.mxu0 %v1331
  %1581 = vmatprep.subr.bf16.mxu0 0
  %1582 = vmatpush1.bf16.msra.mxu0 %v1332
  %1583 = vmatprep.subr.bf16.mxu0 0
  %1584 = vmatpush1.bf16.msra.mxu0 %v1333
  %1585 = vmatprep.subr.bf16.mxu0 0
  %1586 = vmatpush1.bf16.msra.mxu0 %v1334
  %1587 = vmatprep.subr.bf16.mxu0 0
  %1588 = vmatpush1.bf16.msra.mxu0 %v1335
  %1589 = vmatprep.subr.bf16.mxu0 0
  %1590 = vmatpush1.bf16.msra.mxu0 %v1336
  %1591 = vmatprep.subr.bf16.mxu0 0
  %1592 = vmatpush1.bf16.msra.mxu0 %v1337
  %1593 = vmatprep.subr.bf16.mxu0 0
  %1594 = vmatpush1.bf16.msra.mxu0 0
  %1595 = vmatprep.subr.bf16.mxu0 0
  %1596 = vmatpush1.bf16.msra.mxu0 0
  %1597 = vmatprep.subr.bf16.mxu0 0
  %1598 = vmatpush1.bf16.msra.mxu0 0
  %1599 = vmatprep.subr.bf16.mxu0 0
  %1600 = vmatpush1.bf16.msra.mxu0 0
  %1601 = vmatprep.subr.bf16.mxu0 0
  %1602 = vmatpush1.bf16.msra.mxu0 0
  %1603 = vmatprep.subr.bf16.mxu0 0
  %1604 = vmatpush1.bf16.msra.mxu0 0
  %1605 = vmatprep.subr.bf16.mxu0 0
  %1606 = vmatpush1.bf16.msra.mxu0 0
  %1607 = vmatprep.subr.bf16.mxu0 0
  %1608 = vmatpush1.bf16.msra.mxu0 0
  %1609 = vmatprep.mubr.bf16.mxu0 0
  %1610 = vmatmul.mubr.bf16.gmra.mrb[0].mxu0 %v1214
  %v1611 = vpop.f32.mrb[0].mxu0
  %v1612 = vadd.f32 0.0, %v1611
  %v1613 = vpop.f32.mrb[0].mxu0
  %v1614 = vpop.f32.mrb[0].mxu0
  %v1615 = vadd.f32 0.0, %v1614
  %v1616 = vpop.f32.mrb[0].mxu0
  %1617 = vdwg.mxu0
  %v1620 = vrot.slane %v1573, 4
  %v1621 = vrot.slane %v1574, 4
  %v1622 = vsel %vm588, %v1620, %v1621
  %1624 = vmatprep.subr.bf16.mxu0 0
  %1625 = vmatpush1.bf16.msra.mxu0 %v1419
  %1626 = vmatprep.subr.bf16.mxu0 0
  %1627 = vmatpush1.bf16.msra.mxu0 %v1420
  %1628 = vmatprep.subr.bf16.mxu0 0
  %1629 = vmatpush1.bf16.msra.mxu0 %v1421
  %1630 = vmatprep.subr.bf16.mxu0 0
  %1631 = vmatpush1.bf16.msra.mxu0 %v1422
  %1632 = vmatprep.subr.bf16.mxu0 0
  %1633 = vmatpush1.bf16.msra.mxu0 %v1423
  %1634 = vmatprep.subr.bf16.mxu0 0
  %1635 = vmatpush1.bf16.msra.mxu0 %v1424
  %1636 = vmatprep.subr.bf16.mxu0 0
  %1637 = vmatpush1.bf16.msra.mxu0 %v1425
  %1638 = vmatprep.subr.bf16.mxu0 0
  %1639 = vmatpush1.bf16.msra.mxu0 %v1426
  %1640 = vmatprep.subr.bf16.mxu0 0
  %1641 = vmatpush1.bf16.msra.mxu0 0
  %1642 = vmatprep.subr.bf16.mxu0 0
  %1643 = vmatpush1.bf16.msra.mxu0 0
  %1644 = vmatprep.subr.bf16.mxu0 0
  %1645 = vmatpush1.bf16.msra.mxu0 0
  %1646 = vmatprep.subr.bf16.mxu0 0
  %1647 = vmatpush1.bf16.msra.mxu0 0
  %1648 = vmatprep.subr.bf16.mxu0 0
  %1649 = vmatpush1.bf16.msra.mxu0 0
  %1650 = vmatprep.subr.bf16.mxu0 0
  %1651 = vmatpush1.bf16.msra.mxu0 0
  %1652 = vmatprep.subr.bf16.mxu0 0
  %1653 = vmatpush1.bf16.msra.mxu0 0
  %1654 = vmatprep.subr.bf16.mxu0 0
  %1655 = vmatpush1.bf16.msra.mxu0 0
  %1656 = vmatprep.mubr.bf16.mxu0 0
  %1657 = vmatmul.mubr.bf16.gmra.mrb[0].mxu0 %v1622
  %v1658 = vpop.f32.mrb[0].mxu0
  %v1659 = vadd.f32 %v1612, %v1658
  %v1660 = vpop.f32.mrb[0].mxu0
  %v1661 = vpop.f32.mrb[0].mxu0
  %v1662 = vadd.f32 %v1615, %v1661
  %v1663 = vpop.f32.mrb[0].mxu0
  %1664 = vdwg.mxu0
  %v1667 = vrot.slane %v1575, 5
  %v1668 = vrot.slane %v1576, 5
  %v1669 = vsel %vm636, %v1667, %v1668
  %1671 = vmatprep.subr.bf16.mxu0 0
  %1672 = vmatpush1.bf16.msra.mxu0 %v1514
  %1673 = vmatprep.subr.bf16.mxu0 0
  %1674 = vmatpush1.bf16.msra.mxu0 %v1515
  %1675 = vmatprep.subr.bf16.mxu0 0
  %1676 = vmatpush1.bf16.msra.mxu0 %v1516
  %1677 = vmatprep.subr.bf16.mxu0 0
  %1678 = vmatpush1.bf16.msra.mxu0 %v1517
  %1679 = vmatprep.subr.bf16.mxu0 0
  %1680 = vmatpush1.bf16.msra.mxu0 %v1518
  %1681 = vmatprep.subr.bf16.mxu0 0
  %1682 = vmatpush1.bf16.msra.mxu0 %v1519
  %1683 = vmatprep.subr.bf16.mxu0 0
  %1684 = vmatpush1.bf16.msra.mxu0 %v1520
  %1685 = vmatprep.subr.bf16.mxu0 0
  %1686 = vmatpush1.bf16.msra.mxu0 %v1521
  %1687 = vmatprep.subr.bf16.mxu0 0
  %1688 = vmatpush1.bf16.msra.mxu0 0
  %1689 = vmatprep.subr.bf16.mxu0 0
  %1690 = vmatpush1.bf16.msra.mxu0 0
  %1691 = vmatprep.subr.bf16.mxu0 0
  %1692 = vmatpush1.bf16.msra.mxu0 0
  %1693 = vmatprep.subr.bf16.mxu0 0
  %1694 = vmatpush1.bf16.msra.mxu0 0
  %1695 = vmatprep.subr.bf16.mxu0 0
  %1696 = vmatpush1.bf16.msra.mxu0 0
  %1697 = vmatprep.subr.bf16.mxu0 0
  %1698 = vmatpush1.bf16.msra.mxu0 0
  %1699 = vmatprep.subr.bf16.mxu0 0
  %1700 = vmatpush1.bf16.msra.mxu0 0
  %1701 = vmatprep.subr.bf16.mxu0 0
  %1702 = vmatpush1.bf16.msra.mxu0 0
  %1703 = vmatprep.mubr.bf16.mxu0 0
  %1704 = vmatmul.mubr.bf16.gmra.mrb[0].mxu0 %v1669
  %v1705 = vpop.f32.mrb[0].mxu0
  %v1706 = vadd.f32 0.0, %v1705
  %v1707 = vpop.f32.mrb[0].mxu0
  %v1708 = vpop.f32.mrb[0].mxu0
  %v1709 = vadd.f32 0.0, %v1708
  %v1710 = vpop.f32.mrb[0].mxu0
  %1711 = vdwg.mxu0
  %v1712 = vadd.f32 %v1659, %v1706
  %v1713 = vadd.f32 %v1662, %v1709
  %v1714 = vlaneseq
  %v1715 = vshrl.u32 %v1714, 7
  %v1716 = vsub.s32 3, %v1715
  %v1717 = vrot.slane %v58, %v1716
  %v1718 = vadd.f32 %v1571, %v1717
  %v1719 = vadd.f32 %v1572, %v1717
  %v1720 = vadd.f32 %v1712, %v1717
  %v1721 = vadd.f32 %v1713, %v1717
  %v1722 = vmax.f32 %v1718, 0.0
  %v1723 = vmax.f32 %v1719, 0.0
  %v1724 = vmax.f32 %v1720, 0.0
  %v1725 = vmax.f32 %v1721, 0.0
  %v1726 = vpack.c.bf16 %v1723, %v1722
  %v1727 = vpack.c.bf16 %v1725, %v1724
  %v1728 = vld [vmem:[%s4] sm:$0xf]
  %v1729 = vld [vmem:[%s4 + $0x4] sm:$0xf]
  %v1730 = vld [vmem:[%s4 + $0x8] sm:$0xf]
  %v1731 = vld [vmem:[%s4 + $0xc] sm:$0xf]
  %v1732 = vld [vmem:[%s4 + $0x10] sm:$0xf]
  %v1733 = vld [vmem:[%s4 + $0x14] sm:$0xf]
  %v1734 = vld [vmem:[%s4 + $0x18] sm:$0xf]
  %v1735 = vld [vmem:[%s4 + $0x1c] sm:$0xf]
  %v1736 = vld [vmem:[%s4 + $0x20] sm:$0xf]
  %v1737 = vld [vmem:[%s4 + $0x24] sm:$0xf]
  %v1738 = vld [vmem:[%s4 + $0x28] sm:$0xf]
  %v1739 = vld [vmem:[%s4 + $0x2c] sm:$0xf]
  %v1740 = vld [vmem:[%s4 + $0x30] sm:$0xf]
  %v1741 = vld [vmem:[%s4 + $0x34] sm:$0xf]
  %v1742 = vld [vmem:[%s4 + $0x38] sm:$0xf]
  %v1743 = vld [vmem:[%s4 + $0x3c] sm:$0xf]
  %s1744 = scalar_lea.vmem %s4, 64
  %v1745 = vld [vmem:[%s1744] sm:$0xf]
  %v1746 = vld [vmem:[%s1744 + $0x4] sm:$0xf]
  %v1747 = vld [vmem:[%s1744 + $0x8] sm:$0xf]
  %v1748 = vld [vmem:[%s1744 + $0xc] sm:$0xf]
  %v1749 = vld [vmem:[%s1744 + $0x10] sm:$0xf]
  %v1750 = vld [vmem:[%s1744 + $0x14] sm:$0xf]
  %v1751 = vld [vmem:[%s1744 + $0x18] sm:$0xf]
  %v1752 = vld [vmem:[%s1744 + $0x1c] sm:$0xf]
  %v1753 = vld [vmem:[%s1744 + $0x20] sm:$0xf]
  %v1754 = vld [vmem:[%s1744 + $0x24] sm:$0xf]
  %v1755 = vld [vmem:[%s1744 + $0x28] sm:$0xf]
  %v1756 = vld [vmem:[%s1744 + $0x2c] sm:$0xf]
  %v1757 = vld [vmem:[%s1744 + $0x30] sm:$0xf]
  %v1758 = vld [vmem:[%s1744 + $0x34] sm:$0xf]
  %v1759 = vld [vmem:[%s1744 + $0x38] sm:$0xf]
  %v1760 = vld [vmem:[%s1744 + $0x3c] sm:$0xf]
  %s1761 = scalar_lea.vmem %s4, 128
  %v1762 = vld [vmem:[%s1761] sm:$0xf]
  %v1763 = vld [vmem:[%s1761 + $0x4] sm:$0xf]
  %v1764 = vld [vmem:[%s1761 + $0x8] sm:$0xf]
  %v1765 = vld [vmem:[%s1761 + $0xc] sm:$0xf]
  %v1766 = vld [vmem:[%s1761 + $0x10] sm:$0xf]
  %v1767 = vld [vmem:[%s1761 + $0x14] sm:$0xf]
  %v1768 = vld [vmem:[%s1761 + $0x18] sm:$0xf]
  %v1769 = vld [vmem:[%s1761 + $0x1c] sm:$0xf]
  %v1770 = vld [vmem:[%s1761 + $0x20] sm:$0xf]
  %v1771 = vld [vmem:[%s1761 + $0x24] sm:$0xf]
  %v1772 = vld [vmem:[%s1761 + $0x28] sm:$0xf]
  %v1773 = vld [vmem:[%s1761 + $0x2c] sm:$0xf]
  %v1774 = vld [vmem:[%s1761 + $0x30] sm:$0xf]
  %v1775 = vld [vmem:[%s1761 + $0x34] sm:$0xf]
  %v1776 = vld [vmem:[%s1761 + $0x38] sm:$0xf]
  %v1777 = vld [vmem:[%s1761 + $0x3c] sm:$0xf]
  %v1779 = vshrl.u32 %v1726, 16
  %v1781 = vrot.slane %v1779, 7
  %v1782 = vshll.u32 %v1726, 16
  %v1784 = vor.u32 %v1781, %v1782
  %v1787 = vld [vmem:[#allocation2] sm:$0xff]
  %v1788 = vsel %vm236, %v1784, %v1787
  %1789 = vst [vmem:[#allocation2] sm:$0xff] %v1788
  %v1790 = vld [vmem:[#allocation2 + $0x8] sm:$0x1]
  %v1791 = vsel %vm32, %v1781, %v1790
  %1792 = vst [vmem:[#allocation2 + $0x8] sm:$0x1] %v1791
  %v1794 = vshrl.u32 %v1727, 16
  %v1796 = vrot.slane %v1794, 3
  %v1797 = vshll.u32 %v1727, 16
  %v1799 = vrot.slane %v1797, 4
  %v1800 = vor.u32 %v1796, %v1799
  %v1802 = vld [vmem:[#allocation2 + $0x8] sm:$0xf0]
  %v1803 = vsel %vm253, %v1800, %v1802
  %1804 = vst [vmem:[#allocation2 + $0x8] sm:$0xf0] %v1803
  %v1805 = vld [vmem:[#allocation2 + $0x10] sm:$0x1f]
  %v1806 = vsel %vm258, %v1800, %v1805
  %1807 = vst [vmem:[#allocation2 + $0x10] sm:$0x1f] %v1806
  %v1808 = vld [vmem:[#allocation2] sm:$0xff]
  %v1809 = vld [vmem:[#allocation2] sm:$0xfe]
  %v1810 = vld [vmem:[#allocation2 + $0x8] sm:$0x1]
  %v1827 = vunpack.c.l.b16 %v1745
  %v1828 = vunpack.c.l.b16 %v1746
  %v1829 = vunpack.c.l.b16 %v1747
  %v1830 = vunpack.c.l.b16 %v1748
  %v1831 = vunpack.c.l.b16 %v1749
  %v1832 = vunpack.c.l.b16 %v1750
  %v1833 = vunpack.c.l.b16 %v1751
  %v1834 = vunpack.c.l.b16 %v1752
  %v1835 = vunpack.c.l.b16 %v1753
  %v1836 = vunpack.c.l.b16 %v1754
  %v1837 = vunpack.c.l.b16 %v1755
  %v1838 = vunpack.c.l.b16 %v1756
  %v1839 = vunpack.c.l.b16 %v1757
  %v1840 = vunpack.c.l.b16 %v1758
  %v1841 = vunpack.c.l.b16 %v1759
  %v1842 = vunpack.c.l.b16 %v1760
  %v1843 = vpack.c.b16 %v1828, %v1827
  %v1844 = vpack.c.b16 %v1830, %v1829
  %v1845 = vpack.c.b16 %v1832, %v1831
  %v1846 = vpack.c.b16 %v1834, %v1833
  %v1847 = vpack.c.b16 %v1836, %v1835
  %v1848 = vpack.c.b16 %v1838, %v1837
  %v1849 = vpack.c.b16 %v1840, %v1839
  %v1850 = vpack.c.b16 %v1842, %v1841
  %1859 = vmatprep.subr.bf16.mxu0 0
  %1860 = vmatpush1.bf16.msra.mxu0 %v1843
  %1861 = vmatprep.subr.bf16.mxu0 0
  %1862 = vmatpush1.bf16.msra.mxu0 %v1844
  %1863 = vmatprep.subr.bf16.mxu0 0
  %1864 = vmatpush1.bf16.msra.mxu0 %v1845
  %1865 = vmatprep.subr.bf16.mxu0 0
  %1866 = vmatpush1.bf16.msra.mxu0 %v1846
  %1867 = vmatprep.subr.bf16.mxu0 0
  %1868 = vmatpush1.bf16.msra.mxu0 %v1847
  %1869 = vmatprep.subr.bf16.mxu0 0
  %1870 = vmatpush1.bf16.msra.mxu0 %v1848
  %1871 = vmatprep.subr.bf16.mxu0 0
  %1872 = vmatpush1.bf16.msra.mxu0 %v1849
  %1873 = vmatprep.subr.bf16.mxu0 0
  %1874 = vmatpush1.bf16.msra.mxu0 %v1850
  %1875 = vmatprep.subr.bf16.mxu0 0
  %1876 = vmatpush1.bf16.msra.mxu0 0
  %1877 = vmatprep.subr.bf16.mxu0 0
  %1878 = vmatpush1.bf16.msra.mxu0 0
  %1879 = vmatprep.subr.bf16.mxu0 0
  %1880 = vmatpush1.bf16.msra.mxu0 0
  %1881 = vmatprep.subr.bf16.mxu0 0
  %1882 = vmatpush1.bf16.msra.mxu0 0
  %1883 = vmatprep.subr.bf16.mxu0 0
  %1884 = vmatpush1.bf16.msra.mxu0 0
  %1885 = vmatprep.subr.bf16.mxu0 0
  %1886 = vmatpush1.bf16.msra.mxu0 0
  %1887 = vmatprep.subr.bf16.mxu0 0
  %1888 = vmatpush1.bf16.msra.mxu0 0
  %1889 = vmatprep.subr.bf16.mxu0 0
  %1890 = vmatpush1.bf16.msra.mxu0 0
  %1891 = vmatprep.mubr.bf16.mxu0 0
  %1892 = vmatmul.mubr.bf16.gmra.mrb[0].mxu0 %v1726
  %v1893 = vpop.f32.mrb[0].mxu0
  %v1894 = vadd.f32 0.0, %v1893
  %v1895 = vpop.f32.mrb[0].mxu0
  %v1896 = vpop.f32.mrb[0].mxu0
  %v1897 = vadd.f32 0.0, %v1896
  %v1898 = vpop.f32.mrb[0].mxu0
  %1899 = vdwg.mxu0
  %v1916 = vunpack.c.l.b16 %v1728
  %v1917 = vunpack.c.l.b16 %v1729
  %v1918 = vunpack.c.l.b16 %v1730
  %v1919 = vunpack.c.l.b16 %v1731
  %v1920 = vunpack.c.l.b16 %v1732
  %v1921 = vunpack.c.l.b16 %v1733
  %v1922 = vunpack.c.l.b16 %v1734
  %v1923 = vunpack.c.l.b16 %v1735
  %v1924 = vunpack.c.l.b16 %v1736
  %v1925 = vunpack.c.l.b16 %v1737
  %v1926 = vunpack.c.l.b16 %v1738
  %v1927 = vunpack.c.l.b16 %v1739
  %v1928 = vunpack.c.l.b16 %v1740
  %v1929 = vunpack.c.l.b16 %v1741
  %v1930 = vunpack.c.l.b16 %v1742
  %v1931 = vunpack.c.l.b16 %v1743
  %v1932 = vpack.c.b16 %v1917, %v1916
  %v1933 = vpack.c.b16 %v1919, %v1918
  %v1934 = vpack.c.b16 %v1921, %v1920
  %v1935 = vpack.c.b16 %v1923, %v1922
  %v1936 = vpack.c.b16 %v1925, %v1924
  %v1937 = vpack.c.b16 %v1927, %v1926
  %v1938 = vpack.c.b16 %v1929, %v1928
  %v1939 = vpack.c.b16 %v1931, %v1930
  %1948 = vmatprep.subr.bf16.mxu0 0
  %1949 = vmatpush1.bf16.msra.mxu0 %v1932
  %1950 = vmatprep.subr.bf16.mxu0 0
  %1951 = vmatpush1.bf16.msra.mxu0 %v1933
  %1952 = vmatprep.subr.bf16.mxu0 0
  %1953 = vmatpush1.bf16.msra.mxu0 %v1934
  %1954 = vmatprep.subr.bf16.mxu0 0
  %1955 = vmatpush1.bf16.msra.mxu0 %v1935
  %1956 = vmatprep.subr.bf16.mxu0 0
  %1957 = vmatpush1.bf16.msra.mxu0 %v1936
  %1958 = vmatprep.subr.bf16.mxu0 0
  %1959 = vmatpush1.bf16.msra.mxu0 %v1937
  %1960 = vmatprep.subr.bf16.mxu0 0
  %1961 = vmatpush1.bf16.msra.mxu0 %v1938
  %1962 = vmatprep.subr.bf16.mxu0 0
  %1963 = vmatpush1.bf16.msra.mxu0 %v1939
  %1964 = vmatprep.subr.bf16.mxu0 0
  %1965 = vmatpush1.bf16.msra.mxu0 0
  %1966 = vmatprep.subr.bf16.mxu0 0
  %1967 = vmatpush1.bf16.msra.mxu0 0
  %1968 = vmatprep.subr.bf16.mxu0 0
  %1969 = vmatpush1.bf16.msra.mxu0 0
  %1970 = vmatprep.subr.bf16.mxu0 0
  %1971 = vmatpush1.bf16.msra.mxu0 0
  %1972 = vmatprep.subr.bf16.mxu0 0
  %1973 = vmatpush1.bf16.msra.mxu0 0
  %1974 = vmatprep.subr.bf16.mxu0 0
  %1975 = vmatpush1.bf16.msra.mxu0 0
  %1976 = vmatprep.subr.bf16.mxu0 0
  %1977 = vmatpush1.bf16.msra.mxu0 0
  %1978 = vmatprep.subr.bf16.mxu0 0
  %1979 = vmatpush1.bf16.msra.mxu0 0
  %1980 = vmatprep.mubr.bf16.mxu0 0
  %1981 = vmatmul.mubr.bf16.gmra.mrb[0].mxu0 %v1808
  %v1982 = vpop.f32.mrb[0].mxu0
  %v1983 = vadd.f32 %v1894, %v1982
  %v1984 = vpop.f32.mrb[0].mxu0
  %v1985 = vpop.f32.mrb[0].mxu0
  %v1986 = vadd.f32 %v1897, %v1985
  %v1987 = vpop.f32.mrb[0].mxu0
  %1988 = vdwg.mxu0
  %v1991 = vrot.slane %v1809, 1
  %v1992 = vrot.slane %v1810, 1
  %v1993 = vsel %vm445, %v1991, %v1992
  %v2011 = vunpack.c.l.b16 %v1762
  %v2012 = vunpack.c.l.b16 %v1763
  %v2013 = vunpack.c.l.b16 %v1764
  %v2014 = vunpack.c.l.b16 %v1765
  %v2015 = vunpack.c.l.b16 %v1766
  %v2016 = vunpack.c.l.b16 %v1767
  %v2017 = vunpack.c.l.b16 %v1768
  %v2018 = vunpack.c.l.b16 %v1769
  %v2019 = vunpack.c.l.b16 %v1770
  %v2020 = vunpack.c.l.b16 %v1771
  %v2021 = vunpack.c.l.b16 %v1772
  %v2022 = vunpack.c.l.b16 %v1773
  %v2023 = vunpack.c.l.b16 %v1774
  %v2024 = vunpack.c.l.b16 %v1775
  %v2025 = vunpack.c.l.b16 %v1776
  %v2026 = vunpack.c.l.b16 %v1777
  %v2027 = vpack.c.b16 %v2012, %v2011
  %v2028 = vpack.c.b16 %v2014, %v2013
  %v2029 = vpack.c.b16 %v2016, %v2015
  %v2030 = vpack.c.b16 %v2018, %v2017
  %v2031 = vpack.c.b16 %v2020, %v2019
  %v2032 = vpack.c.b16 %v2022, %v2021
  %v2033 = vpack.c.b16 %v2024, %v2023
  %v2034 = vpack.c.b16 %v2026, %v2025
  %2043 = vmatprep.subr.bf16.mxu0 0
  %2044 = vmatpush1.bf16.msra.mxu0 %v2027
  %2045 = vmatprep.subr.bf16.mxu0 0
  %2046 = vmatpush1.bf16.msra.mxu0 %v2028
  %2047 = vmatprep.subr.bf16.mxu0 0
  %2048 = vmatpush1.bf16.msra.mxu0 %v2029
  %2049 = vmatprep.subr.bf16.mxu0 0
  %2050 = vmatpush1.bf16.msra.mxu0 %v2030
  %2051 = vmatprep.subr.bf16.mxu0 0
  %2052 = vmatpush1.bf16.msra.mxu0 %v2031
  %2053 = vmatprep.subr.bf16.mxu0 0
  %2054 = vmatpush1.bf16.msra.mxu0 %v2032
  %2055 = vmatprep.subr.bf16.mxu0 0
  %2056 = vmatpush1.bf16.msra.mxu0 %v2033
  %2057 = vmatprep.subr.bf16.mxu0 0
  %2058 = vmatpush1.bf16.msra.mxu0 %v2034
  %2059 = vmatprep.subr.bf16.mxu0 0
  %2060 = vmatpush1.bf16.msra.mxu0 0
  %2061 = vmatprep.subr.bf16.mxu0 0
  %2062 = vmatpush1.bf16.msra.mxu0 0
  %2063 = vmatprep.subr.bf16.mxu0 0
  %2064 = vmatpush1.bf16.msra.mxu0 0
  %2065 = vmatprep.subr.bf16.mxu0 0
  %2066 = vmatpush1.bf16.msra.mxu0 0
  %2067 = vmatprep.subr.bf16.mxu0 0
  %2068 = vmatpush1.bf16.msra.mxu0 0
  %2069 = vmatprep.subr.bf16.mxu0 0
  %2070 = vmatpush1.bf16.msra.mxu0 0
  %2071 = vmatprep.subr.bf16.mxu0 0
  %2072 = vmatpush1.bf16.msra.mxu0 0
  %2073 = vmatprep.subr.bf16.mxu0 0
  %2074 = vmatpush1.bf16.msra.mxu0 0
  %2075 = vmatprep.mubr.bf16.mxu0 0
  %2076 = vmatmul.mubr.bf16.gmra.mrb[0].mxu0 %v1993
  %v2077 = vpop.f32.mrb[0].mxu0
  %v2078 = vadd.f32 0.0, %v2077
  %v2079 = vpop.f32.mrb[0].mxu0
  %v2080 = vpop.f32.mrb[0].mxu0
  %v2081 = vadd.f32 0.0, %v2080
  %v2082 = vpop.f32.mrb[0].mxu0
  %2083 = vdwg.mxu0
  %v2084 = vadd.f32 %v1983, %v2078
  %v2085 = vadd.f32 %v1986, %v2081
  %v2086 = vld [vmem:[#allocation2 + $0x8] sm:$0xf0]
  %v2087 = vld [vmem:[#allocation2 + $0x10] sm:$0xf]
  %v2088 = vld [vmem:[#allocation2 + $0x8] sm:$0xe0]
  %v2089 = vld [vmem:[#allocation2 + $0x10] sm:$0x1f]
  %2090 = vmatprep.subr.bf16.mxu0 0
  %2091 = vmatpush1.bf16.msra.mxu0 %v1843
  %2092 = vmatprep.subr.bf16.mxu0 0
  %2093 = vmatpush1.bf16.msra.mxu0 %v1844
  %2094 = vmatprep.subr.bf16.mxu0 0
  %2095 = vmatpush1.bf16.msra.mxu0 %v1845
  %2096 = vmatprep.subr.bf16.mxu0 0
  %2097 = vmatpush1.bf16.msra.mxu0 %v1846
  %2098 = vmatprep.subr.bf16.mxu0 0
  %2099 = vmatpush1.bf16.msra.mxu0 %v1847
  %2100 = vmatprep.subr.bf16.mxu0 0
  %2101 = vmatpush1.bf16.msra.mxu0 %v1848
  %2102 = vmatprep.subr.bf16.mxu0 0
  %2103 = vmatpush1.bf16.msra.mxu0 %v1849
  %2104 = vmatprep.subr.bf16.mxu0 0
  %2105 = vmatpush1.bf16.msra.mxu0 %v1850
  %2106 = vmatprep.subr.bf16.mxu0 0
  %2107 = vmatpush1.bf16.msra.mxu0 0
  %2108 = vmatprep.subr.bf16.mxu0 0
  %2109 = vmatpush1.bf16.msra.mxu0 0
  %2110 = vmatprep.subr.bf16.mxu0 0
  %2111 = vmatpush1.bf16.msra.mxu0 0
  %2112 = vmatprep.subr.bf16.mxu0 0
  %2113 = vmatpush1.bf16.msra.mxu0 0
  %2114 = vmatprep.subr.bf16.mxu0 0
  %2115 = vmatpush1.bf16.msra.mxu0 0
  %2116 = vmatprep.subr.bf16.mxu0 0
  %2117 = vmatpush1.bf16.msra.mxu0 0
  %2118 = vmatprep.subr.bf16.mxu0 0
  %2119 = vmatpush1.bf16.msra.mxu0 0
  %2120 = vmatprep.subr.bf16.mxu0 0
  %2121 = vmatpush1.bf16.msra.mxu0 0
  %2122 = vmatprep.mubr.bf16.mxu0 0
  %2123 = vmatmul.mubr.bf16.gmra.mrb[0].mxu0 %v1727
  %v2124 = vpop.f32.mrb[0].mxu0
  %v2125 = vadd.f32 0.0, %v2124
  %v2126 = vpop.f32.mrb[0].mxu0
  %v2127 = vpop.f32.mrb[0].mxu0
  %v2128 = vadd.f32 0.0, %v2127
  %v2129 = vpop.f32.mrb[0].mxu0
  %2130 = vdwg.mxu0
  %v2133 = vrot.slane %v2086, 4
  %v2134 = vrot.slane %v2087, 4
  %v2135 = vsel %vm588, %v2133, %v2134
  %2137 = vmatprep.subr.bf16.mxu0 0
  %2138 = vmatpush1.bf16.msra.mxu0 %v1932
  %2139 = vmatprep.subr.bf16.mxu0 0
  %2140 = vmatpush1.bf16.msra.mxu0 %v1933
  %2141 = vmatprep.subr.bf16.mxu0 0
  %2142 = vmatpush1.bf16.msra.mxu0 %v1934
  %2143 = vmatprep.subr.bf16.mxu0 0
  %2144 = vmatpush1.bf16.msra.mxu0 %v1935
  %2145 = vmatprep.subr.bf16.mxu0 0
  %2146 = vmatpush1.bf16.msra.mxu0 %v1936
  %2147 = vmatprep.subr.bf16.mxu0 0
  %2148 = vmatpush1.bf16.msra.mxu0 %v1937
  %2149 = vmatprep.subr.bf16.mxu0 0
  %2150 = vmatpush1.bf16.msra.mxu0 %v1938
  %2151 = vmatprep.subr.bf16.mxu0 0
  %2152 = vmatpush1.bf16.msra.mxu0 %v1939
  %2153 = vmatprep.subr.bf16.mxu0 0
  %2154 = vmatpush1.bf16.msra.mxu0 0
  %2155 = vmatprep.subr.bf16.mxu0 0
  %2156 = vmatpush1.bf16.msra.mxu0 0
  %2157 = vmatprep.subr.bf16.mxu0 0
  %2158 = vmatpush1.bf16.msra.mxu0 0
  %2159 = vmatprep.subr.bf16.mxu0 0
  %2160 = vmatpush1.bf16.msra.mxu0 0
  %2161 = vmatprep.subr.bf16.mxu0 0
  %2162 = vmatpush1.bf16.msra.mxu0 0
  %2163 = vmatprep.subr.bf16.mxu0 0
  %2164 = vmatpush1.bf16.msra.mxu0 0
  %2165 = vmatprep.subr.bf16.mxu0 0
  %2166 = vmatpush1.bf16.msra.mxu0 0
  %2167 = vmatprep.subr.bf16.mxu0 0
  %2168 = vmatpush1.bf16.msra.mxu0 0
  %2169 = vmatprep.mubr.bf16.mxu0 0
  %2170 = vmatmul.mubr.bf16.gmra.mrb[0].mxu0 %v2135
  %v2171 = vpop.f32.mrb[0].mxu0
  %v2172 = vadd.f32 %v2125, %v2171
  %v2173 = vpop.f32.mrb[0].mxu0
  %v2174 = vpop.f32.mrb[0].mxu0
  %v2175 = vadd.f32 %v2128, %v2174
  %v2176 = vpop.f32.mrb[0].mxu0
  %2177 = vdwg.mxu0
  %v2180 = vrot.slane %v2088, 5
  %v2181 = vrot.slane %v2089, 5
  %v2182 = vsel %vm636, %v2180, %v2181
  %2184 = vmatprep.subr.bf16.mxu0 0
  %2185 = vmatpush1.bf16.msra.mxu0 %v2027
  %2186 = vmatprep.subr.bf16.mxu0 0
  %2187 = vmatpush1.bf16.msra.mxu0 %v2028
  %2188 = vmatprep.subr.bf16.mxu0 0
  %2189 = vmatpush1.bf16.msra.mxu0 %v2029
  %2190 = vmatprep.subr.bf16.mxu0 0
  %2191 = vmatpush1.bf16.msra.mxu0 %v2030
  %2192 = vmatprep.subr.bf16.mxu0 0
  %2193 = vmatpush1.bf16.msra.mxu0 %v2031
  %2194 = vmatprep.subr.bf16.mxu0 0
  %2195 = vmatpush1.bf16.msra.mxu0 %v2032
  %2196 = vmatprep.subr.bf16.mxu0 0
  %2197 = vmatpush1.bf16.msra.mxu0 %v2033
  %2198 = vmatprep.subr.bf16.mxu0 0
  %2199 = vmatpush1.bf16.msra.mxu0 %v2034
  %2200 = vmatprep.subr.bf16.mxu0 0
  %2201 = vmatpush1.bf16.msra.mxu0 0
  %2202 = vmatprep.subr.bf16.mxu0 0
  %2203 = vmatpush1.bf16.msra.mxu0 0
  %2204 = vmatprep.subr.bf16.mxu0 0
  %2205 = vmatpush1.bf16.msra.mxu0 0
  %2206 = vmatprep.subr.bf16.mxu0 0
  %2207 = vmatpush1.bf16.msra.mxu0 0
  %2208 = vmatprep.subr.bf16.mxu0 0
  %2209 = vmatpush1.bf16.msra.mxu0 0
  %2210 = vmatprep.subr.bf16.mxu0 0
  %2211 = vmatpush1.bf16.msra.mxu0 0
  %2212 = vmatprep.subr.bf16.mxu0 0
  %2213 = vmatpush1.bf16.msra.mxu0 0
  %2214 = vmatprep.subr.bf16.mxu0 0
  %2215 = vmatpush1.bf16.msra.mxu0 0
  %2216 = vmatprep.mubr.bf16.mxu0 0
  %2217 = vmatmul.mubr.bf16.gmra.mrb[0].mxu0 %v2182
  %v2218 = vpop.f32.mrb[0].mxu0
  %v2219 = vadd.f32 0.0, %v2218
  %v2220 = vpop.f32.mrb[0].mxu0
  %v2221 = vpop.f32.mrb[0].mxu0
  %v2222 = vadd.f32 0.0, %v2221
  %v2223 = vpop.f32.mrb[0].mxu0
  %2224 = vdwg.mxu0
  %v2225 = vadd.f32 %v2172, %v2219
  %v2226 = vadd.f32 %v2175, %v2222
  %v2227 = vlaneseq
  %v2228 = vshrl.u32 %v2227, 7
  %v2229 = vsub.s32 4, %v2228
  %v2230 = vrot.slane %v58, %v2229
  %v2231 = vadd.f32 %v2084, %v2230
  %v2232 = vadd.f32 %v2085, %v2230
  %v2233 = vadd.f32 %v2225, %v2230
  %v2234 = vadd.f32 %v2226, %v2230
  %v2235 = vadd.f32 %v2231, %v1209
  %v2236 = vadd.f32 %v2232, %v1210
  %v2237 = vadd.f32 %v2233, %v1211
  %v2238 = vadd.f32 %v2234, %v1212
  %v2239 = vmax.f32 %v2235, 0.0
  %v2240 = vmax.f32 %v2236, 0.0
  %v2241 = vmax.f32 %v2237, 0.0
  %v2242 = vmax.f32 %v2238, 0.0
  %v2243 = vpack.c.bf16 %v2240, %v2239
  %v2244 = vpack.c.bf16 %v2242, %v2241
  %v2245 = vld [vmem:[%s6] sm:$0xf]
  %v2246 = vld [vmem:[%s6 + $0x4] sm:$0xf]
  %v2247 = vld [vmem:[%s6 + $0x8] sm:$0xf]
  %v2248 = vld [vmem:[%s6 + $0xc] sm:$0xf]
  %v2249 = vld [vmem:[%s6 + $0x10] sm:$0xf]
  %v2250 = vld [vmem:[%s6 + $0x14] sm:$0xf]
  %v2251 = vld [vmem:[%s6 + $0x18] sm:$0xf]
  %v2252 = vld [vmem:[%s6 + $0x1c] sm:$0xf]
  %v2253 = vld [vmem:[%s6 + $0x20] sm:$0xf]
  %v2254 = vld [vmem:[%s6 + $0x24] sm:$0xf]
  %v2255 = vld [vmem:[%s6 + $0x28] sm:$0xf]
  %v2256 = vld [vmem:[%s6 + $0x2c] sm:$0xf]
  %v2257 = vld [vmem:[%s6 + $0x30] sm:$0xf]
  %v2258 = vld [vmem:[%s6 + $0x34] sm:$0xf]
  %v2259 = vld [vmem:[%s6 + $0x38] sm:$0xf]
  %v2260 = vld [vmem:[%s6 + $0x3c] sm:$0xf]
  %v2261 = vld [vmem:[%s6 + $0x40] sm:$0xf]
  %v2262 = vld [vmem:[%s6 + $0x44] sm:$0xf]
  %v2263 = vld [vmem:[%s6 + $0x48] sm:$0xf]
  %v2264 = vld [vmem:[%s6 + $0x4c] sm:$0xf]
  %v2265 = vld [vmem:[%s6 + $0x50] sm:$0xf]
  %v2266 = vld [vmem:[%s6 + $0x54] sm:$0xf]
  %v2267 = vld [vmem:[%s6 + $0x58] sm:$0xf]
  %v2268 = vld [vmem:[%s6 + $0x5c] sm:$0xf]
  %v2269 = vld [vmem:[%s6 + $0x60] sm:$0xf]
  %v2270 = vld [vmem:[%s6 + $0x64] sm:$0xf]
  %v2271 = vld [vmem:[%s6 + $0x68] sm:$0xf]
  %v2272 = vld [vmem:[%s6 + $0x6c] sm:$0xf]
  %v2273 = vld [vmem:[%s6 + $0x70] sm:$0xf]
  %v2274 = vld [vmem:[%s6 + $0x74] sm:$0xf]
  %v2275 = vld [vmem:[%s6 + $0x78] sm:$0xf]
  %v2276 = vld [vmem:[%s6 + $0x7c] sm:$0xf]
  %v2277 = vld [vmem:[%s6 + $0x80] sm:$0xf]
  %v2278 = vld [vmem:[%s6 + $0x84] sm:$0xf]
  %v2279 = vld [vmem:[%s6 + $0x88] sm:$0xf]
  %v2280 = vld [vmem:[%s6 + $0x8c] sm:$0xf]
  %v2281 = vld [vmem:[%s6 + $0x90] sm:$0xf]
  %v2282 = vld [vmem:[%s6 + $0x94] sm:$0xf]
  %v2283 = vld [vmem:[%s6 + $0x98] sm:$0xf]
  %v2284 = vld [vmem:[%s6 + $0x9c] sm:$0xf]
  %v2285 = vld [vmem:[%s6 + $0xa0] sm:$0xf]
  %v2286 = vld [vmem:[%s6 + $0xa4] sm:$0xf]
  %v2287 = vld [vmem:[%s6 + $0xa8] sm:$0xf]
  %v2288 = vld [vmem:[%s6 + $0xac] sm:$0xf]
  %v2289 = vld [vmem:[%s6 + $0xb0] sm:$0xf]
  %v2290 = vld [vmem:[%s6 + $0xb4] sm:$0xf]
  %v2291 = vld [vmem:[%s6 + $0xb8] sm:$0xf]
  %v2292 = vld [vmem:[%s6 + $0xbc] sm:$0xf]
  %v2293 = vlaneseq
  %v2294 = vshrl.u32 %v2293, 7
  %v2295 = vsub.s32 5, %v2294
  %v2296 = vrot.slane %v58, %v2295
  %v2345 = vunpack.c.l.b16 %v2245
  %v2346 = vunpack.c.l.b16 %v2246
  %v2347 = vunpack.c.l.b16 %v2247
  %v2348 = vunpack.c.l.b16 %v2248
  %v2349 = vunpack.c.l.b16 %v2249
  %v2350 = vunpack.c.l.b16 %v2250
  %v2351 = vunpack.c.l.b16 %v2251
  %v2352 = vunpack.c.l.b16 %v2252
  %v2353 = vunpack.c.l.b16 %v2253
  %v2354 = vunpack.c.l.b16 %v2254
  %v2355 = vunpack.c.l.b16 %v2255
  %v2356 = vunpack.c.l.b16 %v2256
  %v2357 = vunpack.c.l.b16 %v2257
  %v2358 = vunpack.c.l.b16 %v2258
  %v2359 = vunpack.c.l.b16 %v2259
  %v2360 = vunpack.c.l.b16 %v2260
  %v2361 = vunpack.c.l.b16 %v2261
  %v2362 = vunpack.c.l.b16 %v2262
  %v2363 = vunpack.c.l.b16 %v2263
  %v2364 = vunpack.c.l.b16 %v2264
  %v2365 = vunpack.c.l.b16 %v2265
  %v2366 = vunpack.c.l.b16 %v2266
  %v2367 = vunpack.c.l.b16 %v2267
  %v2368 = vunpack.c.l.b16 %v2268
  %v2369 = vunpack.c.l.b16 %v2269
  %v2370 = vunpack.c.l.b16 %v2270
  %v2371 = vunpack.c.l.b16 %v2271
  %v2372 = vunpack.c.l.b16 %v2272
  %v2373 = vunpack.c.l.b16 %v2273
  %v2374 = vunpack.c.l.b16 %v2274
  %v2375 = vunpack.c.l.b16 %v2275
  %v2376 = vunpack.c.l.b16 %v2276
  %v2377 = vunpack.c.l.b16 %v2277
  %v2378 = vunpack.c.l.b16 %v2278
  %v2379 = vunpack.c.l.b16 %v2279
  %v2380 = vunpack.c.l.b16 %v2280
  %v2381 = vunpack.c.l.b16 %v2281
  %v2382 = vunpack.c.l.b16 %v2282
  %v2383 = vunpack.c.l.b16 %v2283
  %v2384 = vunpack.c.l.b16 %v2284
  %v2385 = vunpack.c.l.b16 %v2285
  %v2386 = vunpack.c.l.b16 %v2286
  %v2387 = vunpack.c.l.b16 %v2287
  %v2388 = vunpack.c.l.b16 %v2288
  %v2389 = vunpack.c.l.b16 %v2289
  %v2390 = vunpack.c.l.b16 %v2290
  %v2391 = vunpack.c.l.b16 %v2291
  %v2392 = vunpack.c.l.b16 %v2292
  %v2393 = vpack.c.b16 %v2346, %v2345
  %v2394 = vpack.c.b16 %v2348, %v2347
  %v2395 = vpack.c.b16 %v2350, %v2349
  %v2396 = vpack.c.b16 %v2352, %v2351
  %v2397 = vpack.c.b16 %v2354, %v2353
  %v2398 = vpack.c.b16 %v2356, %v2355
  %v2399 = vpack.c.b16 %v2358, %v2357
  %v2400 = vpack.c.b16 %v2360, %v2359
  %v2401 = vpack.c.b16 %v2362, %v2361
  %v2402 = vpack.c.b16 %v2364, %v2363
  %v2403 = vpack.c.b16 %v2366, %v2365
  %v2404 = vpack.c.b16 %v2368, %v2367
  %v2405 = vpack.c.b16 %v2370, %v2369
  %v2406 = vpack.c.b16 %v2372, %v2371
  %v2407 = vpack.c.b16 %v2374, %v2373
  %v2408 = vpack.c.b16 %v2376, %v2375
  %v2409 = vpack.c.b16 %v2378, %v2377
  %v2410 = vpack.c.b16 %v2380, %v2379
  %v2411 = vpack.c.b16 %v2382, %v2381
  %v2412 = vpack.c.b16 %v2384, %v2383
  %v2413 = vpack.c.b16 %v2386, %v2385
  %v2414 = vpack.c.b16 %v2388, %v2387
  %v2415 = vpack.c.b16 %v2390, %v2389
  %v2416 = vpack.c.b16 %v2392, %v2391
  %2441 = vmatprep.subr.bf16.mxu0 0
  %2442 = vmatpush1.bf16.msra.mxu0 %v2393
  %2443 = vmatprep.subr.bf16.mxu0 0
  %2444 = vmatpush1.bf16.msra.mxu0 %v2394
  %2445 = vmatprep.subr.bf16.mxu0 0
  %2446 = vmatpush1.bf16.msra.mxu0 %v2395
  %2447 = vmatprep.subr.bf16.mxu0 0
  %2448 = vmatpush1.bf16.msra.mxu0 %v2396
  %2449 = vmatprep.subr.bf16.mxu0 0
  %2450 = vmatpush1.bf16.msra.mxu0 %v2397
  %2451 = vmatprep.subr.bf16.mxu0 0
  %2452 = vmatpush1.bf16.msra.mxu0 %v2398
  %2453 = vmatprep.subr.bf16.mxu0 0
  %2454 = vmatpush1.bf16.msra.mxu0 %v2399
  %2455 = vmatprep.subr.bf16.mxu0 0
  %2456 = vmatpush1.bf16.msra.mxu0 %v2400
  %2457 = vmatprep.subr.bf16.mxu0 0
  %2458 = vmatpush1.bf16.msra.mxu0 %v2401
  %2459 = vmatprep.subr.bf16.mxu0 0
  %2460 = vmatpush1.bf16.msra.mxu0 %v2402
  %2461 = vmatprep.subr.bf16.mxu0 0
  %2462 = vmatpush1.bf16.msra.mxu0 %v2403
  %2463 = vmatprep.subr.bf16.mxu0 0
  %2464 = vmatpush1.bf16.msra.mxu0 %v2404
  %2465 = vmatprep.subr.bf16.mxu0 0
  %2466 = vmatpush1.bf16.msra.mxu0 %v2405
  %2467 = vmatprep.subr.bf16.mxu0 0
  %2468 = vmatpush1.bf16.msra.mxu0 %v2406
  %2469 = vmatprep.subr.bf16.mxu0 0
  %2470 = vmatpush1.bf16.msra.mxu0 %v2407
  %2471 = vmatprep.subr.bf16.mxu0 0
  %2472 = vmatpush1.bf16.msra.mxu0 %v2408
  %2473 = vmatprep.mubr.bf16.mxu0 %v1213
  %2474 = vmatmul.mubr.bf16.gmra.mrb[0].mxu0 %v2243
  %v2475 = vpop.f32.mrb[0].mxu0
  %v2476 = vadd.f32 %v2296, %v2475
  %v2477 = vpop.f32.mrb[0].mxu0
  %v2478 = vpop.f32.mrb[0].mxu0
  %v2479 = vadd.f32 %v2296, %v2478
  %v2480 = vpop.f32.mrb[0].mxu0
  %2481 = vmatprep.mubr.bf16.mxu0 %v1214
  %2482 = vmatmul.mubr.bf16.gmra.mrb[0].mxu0 %v2244
  %v2483 = vpop.f32.mrb[0].mxu0
  %v2484 = vadd.f32 %v2296, %v2483
  %v2485 = vpop.f32.mrb[0].mxu0
  %v2486 = vpop.f32.mrb[0].mxu0
  %v2487 = vadd.f32 %v2296, %v2486
  %v2488 = vpop.f32.mrb[0].mxu0
  %2489 = vdwg.mxu0
  %2490 = vmatprep.subr.bf16.mxu0 0
  %2491 = vmatpush1.bf16.msra.mxu0 %v2409
  %2492 = vmatprep.subr.bf16.mxu0 0
  %2493 = vmatpush1.bf16.msra.mxu0 %v2410
  %2494 = vmatprep.subr.bf16.mxu0 0
  %2495 = vmatpush1.bf16.msra.mxu0 %v2411
  %2496 = vmatprep.subr.bf16.mxu0 0
  %2497 = vmatpush1.bf16.msra.mxu0 %v2412
  %2498 = vmatprep.subr.bf16.mxu0 0
  %2499 = vmatpush1.bf16.msra.mxu0 %v2413
  %2500 = vmatprep.subr.bf16.mxu0 0
  %2501 = vmatpush1.bf16.msra.mxu0 %v2414
  %2502 = vmatprep.subr.bf16.mxu0 0
  %2503 = vmatpush1.bf16.msra.mxu0 %v2415
  %2504 = vmatprep.subr.bf16.mxu0 0
  %2505 = vmatpush1.bf16.msra.mxu0 %v2416
  %2506 = vmatprep.subr.bf16.mxu0 0
  %2507 = vmatpush1.bf16.msra.mxu0 0
  %2508 = vmatprep.subr.bf16.mxu0 0
  %2509 = vmatpush1.bf16.msra.mxu0 0
  %2510 = vmatprep.subr.bf16.mxu0 0
  %2511 = vmatpush1.bf16.msra.mxu0 0
  %2512 = vmatprep.subr.bf16.mxu0 0
  %2513 = vmatpush1.bf16.msra.mxu0 0
  %2514 = vmatprep.subr.bf16.mxu0 0
  %2515 = vmatpush1.bf16.msra.mxu0 0
  %2516 = vmatprep.subr.bf16.mxu0 0
  %2517 = vmatpush1.bf16.msra.mxu0 0
  %2518 = vmatprep.subr.bf16.mxu0 0
  %2519 = vmatpush1.bf16.msra.mxu0 0
  %2520 = vmatprep.subr.bf16.mxu0 0
  %2521 = vmatpush1.bf16.msra.mxu0 0
  %2522 = vmatprep.mubr.bf16.mxu0 0
  %2523 = vmatmul.mubr.bf16.gmra.mrb[0].mxu0 %v56
  %v2524 = vpop.f32.mrb[0].mxu0
  %v2525 = vadd.f32 %v2476, %v2524
  %v2526 = vpop.f32.mrb[0].mxu0
  %v2527 = vpop.f32.mrb[0].mxu0
  %v2528 = vadd.f32 %v2479, %v2527
  %v2529 = vpop.f32.mrb[0].mxu0
  %2530 = vmatprep.mubr.bf16.mxu0 0
  %2531 = vmatmul.mubr.bf16.gmra.mrb[0].mxu0 %v57
  %v2532 = vpop.f32.mrb[0].mxu0
  %v2533 = vadd.f32 %v2484, %v2532
  %v2534 = vpop.f32.mrb[0].mxu0
  %v2535 = vpop.f32.mrb[0].mxu0
  %v2536 = vadd.f32 %v2487, %v2535
  %v2537 = vpop.f32.mrb[0].mxu0
  %2538 = vdwg.mxu0
  %v2539 = vadd.f32 %v2525, %v2239
  %v2540 = vadd.f32 %v2528, %v2240
  %v2541 = vadd.f32 %v2533, %v2241
  %v2542 = vadd.f32 %v2536, %v2242
  %v2543 = vmax.f32 %v2539, 0.0
  %v2544 = vmax.f32 %v2540, 0.0
  %v2545 = vmax.f32 %v2541, 0.0
  %v2546 = vmax.f32 %v2542, 0.0
  %2547 = vst [vmem:[%s8] sm:$0xff] %v2543
  %2548 = vst [vmem:[%s8 + $0x8] sm:$0xff] %v2544
  %2549 = vst [vmem:[%s8 + $0x10] sm:$0xff] %v2545
  %2550 = vst [vmem:[%s8 + $0x18] sm:$0xff] %v2546
  // Predicated region
  $region34: #{tree_forward.1} parent=0 // pred_check
    _
  $region35: #{tree_forward.1} parent=0 // pred_check_branch
    %2552 = sbr.rel (0) target = $region37
  $region36: #{tree_forward.1} parent=0 // pred_region
    _
  $region37: #{tree_forward.1} parent=0 // pred_fallthru
    _
  // Predicated region
  $region38: #{tree_forward.1} parent=0 // pred_check
    _
  $region39: #{tree_forward.1} parent=0 // pred_check_branch
    %2554 = sbr.rel (0) target = $region41
  $region40: #{tree_forward.1} parent=0 // pred_region
    _
  $region41: #{tree_forward.1} parent=0 // pred_fallthru
    _

</llo_original>
